<compile_context>
chip_gen: v5e
topology: v5e:2x2
jax: 0.10.0
libtpu: 0.0.40
codegen_flags: <defaults>
</compile_context>

<pallas_src>
import functools

import jax
import jax.numpy as jnp
from jax.experimental import pallas as pl
from jax.experimental.pallas import tpu as pltpu


def _se_gate_mul_kernel(x_ref, w_ref, ws_ref, b_ref, act_ref, out_ref, *, bf16_gating):
    """One Cout block.

    x_ref:   (Cin, 1)  bf16  squeezed SE input (shared across Cout blocks)
    w_ref:   (cb, Cin) int8  per-output-channel-quantized 1x1-conv weight slice
    ws_ref:  (cb, 1)   f32   per-output-channel weight scale
    b_ref:   (cb, 1)   f32   bias slice
    act_ref: (cb, HW)  bf16  activation being gated
    out_ref: (cb, HW)  bf16
    """
    # ReLU in f32 (v5e has no bf16 VPU); exact round-trip back to bf16 for the MXU.
    x = jnp.maximum(x_ref[...].astype(jnp.float32), 0.0).astype(jnp.bfloat16)
    # int8 weights are exact in bf16 (|q| <= 127).  Dequant folds into the (cb,1) result:
    #   dot(q * s, x) == s * dot(q, x)   (s is per output channel == per lhs row).
    w = w_ref[...].astype(jnp.float32).astype(jnp.bfloat16)                 # (cb, Cin)
    s_raw = jnp.dot(w, x, preferred_element_type=jnp.float32)               # (cb, 1) MXU, f32 acc
    s = s_raw * ws_ref[...] + b_ref[...]                                    # dequant + bias, f32
    # Hardsigmoid in f32: clip(x/6 + 1/2, 0, 1)
    gate = jnp.clip(s * (1.0 / 6.0) + 0.5, 0.0, 1.0)                        # (cb, 1)
    if bf16_gating:
        # v6e / v7x: bf16-native VALU -> gate cast once, no full-tile f32 up/downcasts.
        out_ref[...] = gate.astype(jnp.bfloat16) * act_ref[...]
    else:
        # v5e (no bf16 VPU): elementwise stays f32, single bf16 rounding at the store.
        out_ref[...] = (gate * act_ref[...].astype(jnp.float32)).astype(out_ref.dtype)


def _device_kind():
    try:
        return str(jax.devices()[0].device_kind).lower()
    except Exception:
        return ""


def _num_tensorcores(kind):
    # Only split Cout when the chip clearly has 2 TensorCores (megacore v4/v5p, or v7x).
    # Unknown / single-TC chips (v5e, v6e) keep grid=(1,): per-grid-step overhead (~0.35us)
    # exceeds anything overlappable on this ~200 KB working set.
    if any(tag in kind for tag in ("v4", "v5p", "v7", "7x")):
        return 2
    return 1


def _supports_bf16_valu(kind):
    # v6e / v7x VALUs are bf16-native; v5e (and older / unknown) are not -> keep f32 path.
    return any(tag in kind for tag in ("v6", "v7", "7x"))


def quantize_weights_int8(W):
    """Per-output-channel symmetric int8 quantization of the (Cout, Cin) 1x1-conv weight.

    Done once at model-load time in a real deployment; the kernel's HBM read of W drops from
    162 KB (bf16) / 324 KB (f32) to 81 KB (int8) + a 2.3 KB scale vector.
    """
    W = W.astype(jnp.float32)
    absmax = jnp.max(jnp.abs(W), axis=1, keepdims=True)                     # (Cout, 1)
    scale = jnp.maximum(absmax, 1e-30) / 127.0
    W_q = jnp.clip(jnp.round(W / scale), -127.0, 127.0).astype(jnp.int8)
    return W_q, scale


def se_gate_mul(x141, x139, W_q, w_scale, b, *, num_cout_blocks=None):
    """relu(x141) -> 1x1 conv (int8 weight, f32 acc) -> hardsigmoid -> * x139.

    x141: (1, Cin, 1, 1)   x139: (1, Cout, H, W)
    W_q: (Cout, Cin) int8  w_scale: (Cout, 1) f32  b: (Cout,) f32
    """
    N, Cin = x141.shape[0], x141.shape[1]
    Cout, H, Wsp = x139.shape[1], x139.shape[2], x139.shape[3]
    HW = H * Wsp
    assert N == 1, "kernel written for N=1 (as in the reference module)"
    assert W_q.shape == (Cout, Cin) and W_q.dtype == jnp.int8
    assert w_scale.shape == (Cout, 1) and b.shape == (Cout,)

    kind = _device_kind()
    if num_cout_blocks is None:
        num_cout_blocks = _num_tensorcores(kind)
    # Alignment guard: cb must respect int8 (32,128) / bf16 (16,128) / f32 (8,128) tilings.
    if Cout % num_cout_blocks or (Cout // num_cout_blocks) % 32:
        num_cout_blocks = 1
    cb = Cout // num_cout_blocks

    bf16_gating = _supports_bf16_valu(kind)

    # HBM-bound op: big tensors travel as int8 (W) / bf16 (act, out); tiny ones stay f32.
    x_vec = x141.reshape(Cin, 1).astype(jnp.bfloat16)
    b2 = b.reshape(Cout, 1).astype(jnp.float32)
    act = x139.reshape(Cout, HW).astype(jnp.bfloat16)
    ws = w_scale.astype(jnp.float32)

    bytes_accessed = (W_q.size * 1 + ws.size * 4 + b2.size * 4
                      + x_vec.size * 2 + act.size * 2 + Cout * HW * 2)
    flops = 2 * Cout * Cin + 4 * Cout + 2 * Cout * HW

    out = pl.pallas_call(
        functools.partial(_se_gate_mul_kernel, bf16_gating=bf16_gating),
        out_shape=jax.ShapeDtypeStruct((Cout, HW), jnp.bfloat16),
        grid=(num_cout_blocks,),
        in_specs=[
            pl.BlockSpec((Cin, 1), lambda i: (0, 0)),     # shared across Cout blocks
            pl.BlockSpec((cb, Cin), lambda i: (i, 0)),
            pl.BlockSpec((cb, 1), lambda i: (i, 0)),
            pl.BlockSpec((cb, 1), lambda i: (i, 0)),
            pl.BlockSpec((cb, HW), lambda i: (i, 0)),
        ],
        out_specs=pl.BlockSpec((cb, HW), lambda i: (i, 0)),
        compiler_params=pltpu.CompilerParams(
            dimension_semantics=("parallel",),
        ),
        cost_estimate=pl.CostEstimate(
            flops=flops, transcendentals=0, bytes_accessed=bytes_accessed),
    )(x_vec, W_q, ws, b2, act)

    # TODO(synk): the dominant remaining win is fusing this SE gate into the neighboring
    # avg-pool / conv kernels (removes a full read+write of the 576x7x7 activation and one
    # launch); out of scope for this standalone module boundary.
    return out.reshape(N, Cout, H, Wsp)


def reference(x141, x139, W, b):
    """f32 reference of the PyTorch module: relu -> 1x1 conv -> hardsigmoid -> mul."""
    x142 = jnp.maximum(x141, 0.0)
    s = jnp.einsum("oc,nchw->nohw", W, x142) + b.reshape(1, -1, 1, 1)
    x144 = jnp.clip(s / 6.0 + 0.5, 0.0, 1.0)
    return x144 * x139


if __name__ == "__main__":
    key = jax.random.PRNGKey(0)
    k1, k2, k3, k4 = jax.random.split(key, 4)

    Cin, Cout, Hs, Ws = 144, 576, 7, 7

    # Deterministic parameter init (Conv2d(144, 576, 1x1) shapes)
    fan_in = Cin  # 1x1 kernel
    bound = 1.0 / (float(fan_in) ** 0.5)
    W = jax.random.uniform(k1, (Cout, Cin), jnp.float32, -bound, bound)
    b = jax.random.uniform(k2, (Cout,), jnp.float32, -bound, bound)

    # Example inputs matching the module's shapes
    x141 = jax.random.normal(k3, (1, Cin, 1, 1), jnp.float32)
    x139 = jax.random.normal(k4, (1, Cout, Hs, Ws), jnp.float32)

    # Offline weight prep (model-load time): int8 per-channel quantization (perf review).
    W_q, w_scale = quantize_weights_int8(W)

    # bf16 HBM I/O for the activation tensors (perf review).
    x141_bf = x141.astype(jnp.bfloat16)
    x139_bf = x139.astype(jnp.bfloat16)

    out = se_gate_mul(x141_bf, x139_bf, W_q, w_scale, b)
    out = jax.block_until_ready(out)

    assert out.shape == (1, Cout, Hs, Ws), out.shape
    assert out.dtype == jnp.bfloat16, out.dtype
    out_f32 = out.astype(jnp.float32)

    # (a) Tight check vs. the exact math the kernel implements (dequantized int8 weight,
    #     bf16-rounded activations): only bf16 multiply/store rounding differs.
    W_deq = W_q.astype(jnp.float32) * w_scale
    ref_q = reference(x141_bf.astype(jnp.float32), x139_bf.astype(jnp.float32), W_deq, b)
    err_q = float(jnp.max(jnp.abs(out_f32 - ref_q)))
    assert jnp.allclose(out_f32, ref_q, atol=2e-2, rtol=2e-2), err_q

    # (b) Check vs. the original f32 module semantics: int8-weight + bf16 rounding are the
    #     only intentional deviations (both benign -- the gate is clipped to [0,1]).
    ref = reference(x141, x139, W, b)
    err = float(jnp.max(jnp.abs(out_f32 - ref)))
    assert jnp.allclose(out_f32, ref, atol=5e-2, rtol=5e-2), err

    print("KERNEL_OK")
</pallas_src>

<mosaic_0001>
module attributes {stable_mosaic.version = 11 : i64} {
  func.func @_se_gate_mul_kernel(%arg0: i32, %arg1: memref<144x1xbf16, #tpu.memory_space<vmem>>, %arg2: memref<576x144xi8, #tpu.memory_space<vmem>>, %arg3: memref<576x1xf32, #tpu.memory_space<vmem>>, %arg4: memref<576x1xf32, #tpu.memory_space<vmem>>, %arg5: memref<576x49xbf16, #tpu.memory_space<vmem>>, %arg6: memref<576x49xbf16, #tpu.memory_space<vmem>>) attributes {dimension_semantics = [#tpu.dimension_semantics<parallel>], iteration_bounds = array<i64: 1>, scalar_prefetch = 0 : i64, scratch_operands = 0 : i64, tpu.core_type = #tpu.core_type<tc>, window_params = [{pipeline_mode = #tpu.pipeline_mode<synchronous>, transform_indices = @transform_0, window_bounds = array<i64: 144, 1>}, {transform_indices = @transform_1, window_bounds = array<i64: 576, 144>}, {transform_indices = @transform_2, window_bounds = array<i64: 576, 1>}, {transform_indices = @transform_3, window_bounds = array<i64: 576, 1>}, {transform_indices = @transform_4, window_bounds = array<i64: 576, 49>}, {transform_indices = @transform_5, window_bounds = array<i64: 576, 49>}]} {
    %c0 = arith.constant 0 : index
    %c0_0 = arith.constant 0 : index
    %0 = vector.load %arg1[%c0, %c0_0] : memref<144x1xbf16, #tpu.memory_space<vmem>>, vector<144x1xbf16>
    %1 = arith.extf %0 : vector<144x1xbf16> to vector<144x1xf32>
    %cst = arith.constant 0.000000e+00 : f32
    %2 = vector.broadcast %cst : f32 to vector<144x1xf32>
    %3 = arith.maximumf %1, %2 : vector<144x1xf32>
    %4 = arith.truncf %3 : vector<144x1xf32> to vector<144x1xbf16>
    %c0_1 = arith.constant 0 : index
    %c0_2 = arith.constant 0 : index
    %5 = vector.load %arg2[%c0_1, %c0_2] : memref<576x144xi8, #tpu.memory_space<vmem>>, vector<576x144xi8>
    %6 = arith.sitofp %5 : vector<576x144xi8> to vector<576x144xf32>
    %7 = arith.truncf %6 : vector<576x144xf32> to vector<576x144xbf16>
    %cst_3 = arith.constant dense<0.000000e+00> : vector<576x1xf32>
    %8 = tpu.matmul %7, %4, %cst_3 {dimension_numbers = #tpu.dot_dimension_numbers<[1], [0], [0], [1], [0, 0, 1, 1], [], []>} : vector<576x144xbf16>, vector<144x1xbf16>, vector<576x1xf32> -> vector<576x1xf32>
    %c0_4 = arith.constant 0 : index
    %c0_5 = arith.constant 0 : index
    %9 = vector.load %arg3[%c0_4, %c0_5] : memref<576x1xf32, #tpu.memory_space<vmem>>, vector<576x1xf32>
    %10 = arith.mulf %8, %9 : vector<576x1xf32>
    %c0_6 = arith.constant 0 : index
    %c0_7 = arith.constant 0 : index
    %11 = vector.load %arg4[%c0_6, %c0_7] : memref<576x1xf32, #tpu.memory_space<vmem>>, vector<576x1xf32>
    %12 = arith.addf %10, %11 : vector<576x1xf32>
    %cst_8 = arith.constant 0.166666672 : f32
    %13 = vector.broadcast %cst_8 : f32 to vector<576x1xf32>
    %14 = arith.mulf %12, %13 : vector<576x1xf32>
    %cst_9 = arith.constant 5.000000e-01 : f32
    %15 = vector.broadcast %cst_9 : f32 to vector<576x1xf32>
    %16 = arith.addf %14, %15 : vector<576x1xf32>
    %cst_10 = arith.constant 0.000000e+00 : f32
    %cst_11 = arith.constant 1.000000e+00 : f32
    %17 = vector.broadcast %cst_10 : f32 to vector<576x1xf32>
    %18 = arith.maximumf %17, %16 : vector<576x1xf32>
    %19 = vector.broadcast %cst_11 : f32 to vector<576x1xf32>
    %20 = arith.minimumf %19, %18 : vector<576x1xf32>
    %c0_12 = arith.constant 0 : index
    %c0_13 = arith.constant 0 : index
    %21 = vector.load %arg5[%c0_12, %c0_13] : memref<576x49xbf16, #tpu.memory_space<vmem>>, vector<576x49xbf16>
    %22 = arith.extf %21 : vector<576x49xbf16> to vector<576x49xf32>
    %23 = vector.broadcast %20 : vector<576x1xf32> to vector<576x49xf32>
    %24 = arith.mulf %23, %22 : vector<576x49xf32>
    %25 = arith.truncf %24 : vector<576x49xf32> to vector<576x49xbf16>
    %c0_14 = arith.constant 0 : index
    %c0_15 = arith.constant 0 : index
    %26 = vector.load %arg6[%c0_14, %c0_15] : memref<576x49xbf16, #tpu.memory_space<vmem>>, vector<576x49xbf16>
    tpu.vector_store %arg6[%c0_14, %c0_15], %25 {strides = array<i32>} : memref<576x49xbf16, #tpu.memory_space<vmem>>, vector<576x49xbf16>,
    return
  }
  func.func @transform_0(%arg0: i32) -> (i32, i32) {
    %c0_i32 = arith.constant 0 : i32
    %c0_i32_0 = arith.constant 0 : i32
    %c0_i32_1 = arith.constant 0 : i32
    return %c0_i32, %c0_i32_0 : i32, i32
  }
  func.func @transform_1(%arg0: i32) -> (i32, i32) {
    %c0_i32 = arith.constant 0 : i32
    %c0_i32_0 = arith.constant 0 : i32
    return %arg0, %c0_i32 : i32, i32
  }
  func.func @transform_2(%arg0: i32) -> (i32, i32) {
    %c0_i32 = arith.constant 0 : i32
    %c0_i32_0 = arith.constant 0 : i32
    return %arg0, %c0_i32 : i32, i32
  }
  func.func @transform_3(%arg0: i32) -> (i32, i32) {
    %c0_i32 = arith.constant 0 : i32
    %c0_i32_0 = arith.constant 0 : i32
    return %arg0, %c0_i32 : i32, i32
  }
  func.func @transform_4(%arg0: i32) -> (i32, i32) {
    %c0_i32 = arith.constant 0 : i32
    %c0_i32_0 = arith.constant 0 : i32
    return %arg0, %c0_i32 : i32, i32
  }
  func.func @transform_5(%arg0: i32) -> (i32, i32) {
    %c0_i32 = arith.constant 0 : i32
    %c0_i32_0 = arith.constant 0 : i32
    return %arg0, %c0_i32 : i32, i32
  }
}

</mosaic_0001>

<llo_original>
// kernel: tpu_custom_call.1
$region0: #{tpu_custom_call.1}
  #allocation0 [shape = 'u32[]', space=smem, size = 0x4, offset = 0x4, fixed_abs, tag = 'smem constant byte address 0x4 - core index']
  #allocation1 [shape = 'u32[72,128]{1,0:T(1,128)}', space=vmem, size = 0x9000, scoped, tag = 'internal scratch']
  %s0 = inlined_call_operand.vmem [shape: bf16[144,1], index: 0, kind: input, shape index: {}]
  %s1 = inlined_call_operand.vmem [shape: s8[576,144], index: 1, kind: input, shape index: {}]
  %s2 = inlined_call_operand.vmem [shape: f32[576,1], index: 2, kind: input, shape index: {}]
  %s3 = inlined_call_operand.vmem [shape: f32[576,1], index: 3, kind: input, shape index: {}]
  %s4 = inlined_call_operand.vmem [shape: bf16[576,49], index: 4, kind: input, shape index: {}]
  %s5 = inlined_call_operand.vmem [shape: bf16[576,49], index: 5, kind: output, shape index: {}]
  %s6 = sld [smem:[#allocation0]]
  $region30: #{tpu_custom_call.1} parent=0
    _
  %s8 = ssub.s32 1, %s6
  %s9 = scalar_select 0, %s8, %s6
  // Predicated region
  $region2: #{tpu_custom_call.1} parent=0 // pred_check
    _
  $region3: #{tpu_custom_call.1} parent=0 // pred_check_branch
    %11 = sbr.rel (0) target = $region5
  $region4: #{tpu_custom_call.1} parent=0 // pred_region
    _
  $region5: #{tpu_custom_call.1} parent=0 // pred_fallthru
    _
  // Predicated region
  $region6: #{tpu_custom_call.1} parent=0 // pred_check
    _
  $region7: #{tpu_custom_call.1} parent=0 // pred_check_branch
    %13 = sbr.rel (0) target = $region9
  $region8: #{tpu_custom_call.1} parent=0 // pred_region
    _
  $region9: #{tpu_custom_call.1} parent=0 // pred_fallthru
    _
  // Predicated region
  $region10: #{tpu_custom_call.1} parent=0 // pred_check
    _
  $region11: #{tpu_custom_call.1} parent=0 // pred_check_branch
    %15 = sbr.rel (0) target = $region13
  $region12: #{tpu_custom_call.1} parent=0 // pred_region
    _
  $region13: #{tpu_custom_call.1} parent=0 // pred_fallthru
    _
  // Predicated region
  $region14: #{tpu_custom_call.1} parent=0 // pred_check
    _
  $region15: #{tpu_custom_call.1} parent=0 // pred_check_branch
    %17 = sbr.rel (0) target = $region17
  $region16: #{tpu_custom_call.1} parent=0 // pred_region
    _
  $region17: #{tpu_custom_call.1} parent=0 // pred_fallthru
    _
  // Predicated region
  $region18: #{tpu_custom_call.1} parent=0 // pred_check
    _
  $region19: #{tpu_custom_call.1} parent=0 // pred_check_branch
    %19 = sbr.rel (0) target = $region21
  $region20: #{tpu_custom_call.1} parent=0 // pred_region
    _
  $region21: #{tpu_custom_call.1} parent=0 // pred_fallthru
    _
  %v21 = vld [vmem:[%s0] sm:$0xf]
  %v22 = vld [vmem:[%s0 + $0x4] sm:$0xf]
  %v23 = vld [vmem:[%s0 + $0x8] sm:$0xf]
  %v24 = vld [vmem:[%s0 + $0xc] sm:$0xf]
  %v25 = vld [vmem:[%s0 + $0x10] sm:$0xf]
  %v26 = vld [vmem:[%s0 + $0x14] sm:$0xf]
  %v27 = vld [vmem:[%s0 + $0x18] sm:$0xf]
  %v28 = vld [vmem:[%s0 + $0x1c] sm:$0xf]
  %v29 = vld [vmem:[%s0 + $0x20] sm:$0xf]
  %v30 = vld [vmem:[%s0 + $0x24] sm:$0xf]
  %v31 = vld [vmem:[%s0 + $0x28] sm:$0xf]
  %v32 = vld [vmem:[%s0 + $0x2c] sm:$0xf]
  %v33 = vld [vmem:[%s0 + $0x30] sm:$0xf]
  %v34 = vld [vmem:[%s0 + $0x34] sm:$0xf]
  %v35 = vld [vmem:[%s0 + $0x38] sm:$0xf]
  %v36 = vld [vmem:[%s0 + $0x3c] sm:$0xf]
  %v37 = vld [vmem:[%s0 + $0x40] sm:$0xf]
  %v38 = vld [vmem:[%s0 + $0x44] sm:$0xf]
  %v39 = vunpack.c.l.bf16 %v21
  %v40 = vunpack.c.l.bf16 %v22
  %v41 = vunpack.c.l.bf16 %v23
  %v42 = vunpack.c.l.bf16 %v24
  %v43 = vunpack.c.l.bf16 %v25
  %v44 = vunpack.c.l.bf16 %v26
  %v45 = vunpack.c.l.bf16 %v27
  %v46 = vunpack.c.l.bf16 %v28
  %v47 = vunpack.c.l.bf16 %v29
  %v48 = vunpack.c.l.bf16 %v30
  %v49 = vunpack.c.l.bf16 %v31
  %v50 = vunpack.c.l.bf16 %v32
  %v51 = vunpack.c.l.bf16 %v33
  %v52 = vunpack.c.l.bf16 %v34
  %v53 = vunpack.c.l.bf16 %v35
  %v54 = vunpack.c.l.bf16 %v36
  %v55 = vunpack.c.l.bf16 %v37
  %v56 = vunpack.c.l.bf16 %v38
  %v57 = vmax.f32 %v39, 0.0
  %v58 = vmax.f32 %v40, 0.0
  %v59 = vmax.f32 %v41, 0.0
  %v60 = vmax.f32 %v42, 0.0
  %v61 = vmax.f32 %v43, 0.0
  %v62 = vmax.f32 %v44, 0.0
  %v63 = vmax.f32 %v45, 0.0
  %v64 = vmax.f32 %v46, 0.0
  %v65 = vmax.f32 %v47, 0.0
  %v66 = vmax.f32 %v48, 0.0
  %v67 = vmax.f32 %v49, 0.0
  %v68 = vmax.f32 %v50, 0.0
  %v69 = vmax.f32 %v51, 0.0
  %v70 = vmax.f32 %v52, 0.0
  %v71 = vmax.f32 %v53, 0.0
  %v72 = vmax.f32 %v54, 0.0
  %v73 = vmax.f32 %v55, 0.0
  %v74 = vmax.f32 %v56, 0.0
  %v75 = vpack.c.bf16 %v58, %v57
  %v76 = vpack.c.bf16 %v60, %v59
  %v77 = vpack.c.bf16 %v62, %v61
  %v78 = vpack.c.bf16 %v64, %v63
  %v79 = vpack.c.bf16 %v66, %v65
  %v80 = vpack.c.bf16 %v68, %v67
  %v81 = vpack.c.bf16 %v70, %v69
  %v82 = vpack.c.bf16 %v72, %v71
  %v83 = vpack.c.bf16 %v74, %v73
  %v84 = vld [vmem:[%s1] sm:$0xff]
  %v85 = vld [vmem:[%s1 + $0x8] sm:$0xff]
  %v86 = vld [vmem:[%s1 + $0x10] sm:$0xff]
  %v87 = vld [vmem:[%s1 + $0x18] sm:$0xff]
  %v88 = vld [vmem:[%s1 + $0x20] sm:$0xff]
  %v89 = vld [vmem:[%s1 + $0x28] sm:$0xff]
  %v90 = vld [vmem:[%s1 + $0x30] sm:$0xff]
  %v91 = vld [vmem:[%s1 + $0x38] sm:$0xff]
  %v92 = vld [vmem:[%s1 + $0x40] sm:$0xff]
  %v93 = vld [vmem:[%s1 + $0x48] sm:$0xff]
  %v94 = vld [vmem:[%s1 + $0x50] sm:$0xff]
  %v95 = vld [vmem:[%s1 + $0x58] sm:$0xff]
  %v96 = vld [vmem:[%s1 + $0x60] sm:$0xff]
  %v97 = vld [vmem:[%s1 + $0x68] sm:$0xff]
  %v98 = vld [vmem:[%s1 + $0x70] sm:$0xff]
  %v99 = vld [vmem:[%s1 + $0x78] sm:$0xff]
  %v100 = vld [vmem:[%s1 + $0x80] sm:$0xff]
  %v101 = vld [vmem:[%s1 + $0x88] sm:$0xff]
  %v102 = vld [vmem:[%s1 + $0x90] sm:$0xff]
  %v103 = vld [vmem:[%s1 + $0x98] sm:$0xff]
  %v104 = vld [vmem:[%s1 + $0xa0] sm:$0xff]
  %v105 = vld [vmem:[%s1 + $0xa8] sm:$0xff]
  %v106 = vld [vmem:[%s1 + $0xb0] sm:$0xff]
  %v107 = vld [vmem:[%s1 + $0xb8] sm:$0xff]
  %v108 = vld [vmem:[%s1 + $0xc0] sm:$0xff]
  %v109 = vld [vmem:[%s1 + $0xc8] sm:$0xff]
  %v110 = vld [vmem:[%s1 + $0xd0] sm:$0xff]
  %v111 = vld [vmem:[%s1 + $0xd8] sm:$0xff]
  %v112 = vld [vmem:[%s1 + $0xe0] sm:$0xff]
  %v113 = vld [vmem:[%s1 + $0xe8] sm:$0xff]
  %v114 = vld [vmem:[%s1 + $0xf0] sm:$0xff]
  %v115 = vld [vmem:[%s1 + $0xf8] sm:$0xff]
  %v116 = vld [vmem:[%s1 + $0x100] sm:$0xff]
  %v117 = vld [vmem:[%s1 + $0x108] sm:$0xff]
  %v118 = vld [vmem:[%s1 + $0x110] sm:$0xff]
  %v119 = vld [vmem:[%s1 + $0x118] sm:$0xff]
  %v120 = vunpack.c.0.s8 %v84
  %v121 = vunpack.c.0.s8 %v85
  %v122 = vunpack.c.1.s8 %v84
  %v123 = vunpack.c.1.s8 %v85
  %v124 = vunpack.c.2.s8 %v84
  %v125 = vunpack.c.2.s8 %v85
  %v126 = vunpack.c.3.s8 %v84
  %v127 = vunpack.c.3.s8 %v85
  %v128 = vunpack.c.0.s8 %v86
  %v129 = vunpack.c.0.s8 %v87
  %v130 = vunpack.c.1.s8 %v86
  %v131 = vunpack.c.1.s8 %v87
  %v132 = vunpack.c.2.s8 %v86
  %v133 = vunpack.c.2.s8 %v87
  %v134 = vunpack.c.3.s8 %v86
  %v135 = vunpack.c.3.s8 %v87
  %v136 = vunpack.c.0.s8 %v88
  %v137 = vunpack.c.0.s8 %v89
  %v138 = vunpack.c.1.s8 %v88
  %v139 = vunpack.c.1.s8 %v89
  %v140 = vunpack.c.2.s8 %v88
  %v141 = vunpack.c.2.s8 %v89
  %v142 = vunpack.c.3.s8 %v88
  %v143 = vunpack.c.3.s8 %v89
  %v144 = vunpack.c.0.s8 %v90
  %v145 = vunpack.c.0.s8 %v91
  %v146 = vunpack.c.1.s8 %v90
  %v147 = vunpack.c.1.s8 %v91
  %v148 = vunpack.c.2.s8 %v90
  %v149 = vunpack.c.2.s8 %v91
  %v150 = vunpack.c.3.s8 %v90
  %v151 = vunpack.c.3.s8 %v91
  %v152 = vunpack.c.0.s8 %v92
  %v153 = vunpack.c.0.s8 %v93
  %v154 = vunpack.c.1.s8 %v92
  %v155 = vunpack.c.1.s8 %v93
  %v156 = vunpack.c.2.s8 %v92
  %v157 = vunpack.c.2.s8 %v93
  %v158 = vunpack.c.3.s8 %v92
  %v159 = vunpack.c.3.s8 %v93
  %v160 = vunpack.c.0.s8 %v94
  %v161 = vunpack.c.0.s8 %v95
  %v162 = vunpack.c.1.s8 %v94
  %v163 = vunpack.c.1.s8 %v95
  %v164 = vunpack.c.2.s8 %v94
  %v165 = vunpack.c.2.s8 %v95
  %v166 = vunpack.c.3.s8 %v94
  %v167 = vunpack.c.3.s8 %v95
  %v168 = vunpack.c.0.s8 %v96
  %v169 = vunpack.c.0.s8 %v97
  %v170 = vunpack.c.1.s8 %v96
  %v171 = vunpack.c.1.s8 %v97
  %v172 = vunpack.c.2.s8 %v96
  %v173 = vunpack.c.2.s8 %v97
  %v174 = vunpack.c.3.s8 %v96
  %v175 = vunpack.c.3.s8 %v97
  %v176 = vunpack.c.0.s8 %v98
  %v177 = vunpack.c.0.s8 %v99
  %v178 = vunpack.c.1.s8 %v98
  %v179 = vunpack.c.1.s8 %v99
  %v180 = vunpack.c.2.s8 %v98
  %v181 = vunpack.c.2.s8 %v99
  %v182 = vunpack.c.3.s8 %v98
  %v183 = vunpack.c.3.s8 %v99
  %v184 = vunpack.c.0.s8 %v100
  %v185 = vunpack.c.0.s8 %v101
  %v186 = vunpack.c.1.s8 %v100
  %v187 = vunpack.c.1.s8 %v101
  %v188 = vunpack.c.2.s8 %v100
  %v189 = vunpack.c.2.s8 %v101
  %v190 = vunpack.c.3.s8 %v100
  %v191 = vunpack.c.3.s8 %v101
  %v192 = vunpack.c.0.s8 %v102
  %v193 = vunpack.c.0.s8 %v103
  %v194 = vunpack.c.1.s8 %v102
  %v195 = vunpack.c.1.s8 %v103
  %v196 = vunpack.c.2.s8 %v102
  %v197 = vunpack.c.2.s8 %v103
  %v198 = vunpack.c.3.s8 %v102
  %v199 = vunpack.c.3.s8 %v103
  %v200 = vunpack.c.0.s8 %v104
  %v201 = vunpack.c.0.s8 %v105
  %v202 = vunpack.c.1.s8 %v104
  %v203 = vunpack.c.1.s8 %v105
  %v204 = vunpack.c.2.s8 %v104
  %v205 = vunpack.c.2.s8 %v105
  %v206 = vunpack.c.3.s8 %v104
  %v207 = vunpack.c.3.s8 %v105
  %v208 = vunpack.c.0.s8 %v106
  %v209 = vunpack.c.0.s8 %v107
  %v210 = vunpack.c.1.s8 %v106
  %v211 = vunpack.c.1.s8 %v107
  %v212 = vunpack.c.2.s8 %v106
  %v213 = vunpack.c.2.s8 %v107
  %v214 = vunpack.c.3.s8 %v106
  %v215 = vunpack.c.3.s8 %v107
  %v216 = vunpack.c.0.s8 %v108
  %v217 = vunpack.c.0.s8 %v109
  %v218 = vunpack.c.1.s8 %v108
  %v219 = vunpack.c.1.s8 %v109
  %v220 = vunpack.c.2.s8 %v108
  %v221 = vunpack.c.2.s8 %v109
  %v222 = vunpack.c.3.s8 %v108
  %v223 = vunpack.c.3.s8 %v109
  %v224 = vunpack.c.0.s8 %v110
  %v225 = vunpack.c.0.s8 %v111
  %v226 = vunpack.c.1.s8 %v110
  %v227 = vunpack.c.1.s8 %v111
  %v228 = vunpack.c.2.s8 %v110
  %v229 = vunpack.c.2.s8 %v111
  %v230 = vunpack.c.3.s8 %v110
  %v231 = vunpack.c.3.s8 %v111
  %v232 = vunpack.c.0.s8 %v112
  %v233 = vunpack.c.0.s8 %v113
  %v234 = vunpack.c.1.s8 %v112
  %v235 = vunpack.c.1.s8 %v113
  %v236 = vunpack.c.2.s8 %v112
  %v237 = vunpack.c.2.s8 %v113
  %v238 = vunpack.c.3.s8 %v112
  %v239 = vunpack.c.3.s8 %v113
  %v240 = vunpack.c.0.s8 %v114
  %v241 = vunpack.c.0.s8 %v115
  %v242 = vunpack.c.1.s8 %v114
  %v243 = vunpack.c.1.s8 %v115
  %v244 = vunpack.c.2.s8 %v114
  %v245 = vunpack.c.2.s8 %v115
  %v246 = vunpack.c.3.s8 %v114
  %v247 = vunpack.c.3.s8 %v115
  %v248 = vunpack.c.0.s8 %v116
  %v249 = vunpack.c.0.s8 %v117
  %v250 = vunpack.c.1.s8 %v116
  %v251 = vunpack.c.1.s8 %v117
  %v252 = vunpack.c.2.s8 %v116
  %v253 = vunpack.c.2.s8 %v117
  %v254 = vunpack.c.3.s8 %v116
  %v255 = vunpack.c.3.s8 %v117
  %v256 = vunpack.c.0.s8 %v118
  %v257 = vunpack.c.0.s8 %v119
  %v258 = vunpack.c.1.s8 %v118
  %v259 = vunpack.c.1.s8 %v119
  %v260 = vunpack.c.2.s8 %v118
  %v261 = vunpack.c.2.s8 %v119
  %v262 = vunpack.c.3.s8 %v118
  %v263 = vunpack.c.3.s8 %v119
  %v264 = vcvt.s32.f32 %v120
  %v265 = vcvt.s32.f32 %v121
  %v266 = vcvt.s32.f32 %v122
  %v267 = vcvt.s32.f32 %v123
  %v268 = vcvt.s32.f32 %v124
  %v269 = vcvt.s32.f32 %v125
  %v270 = vcvt.s32.f32 %v126
  %v271 = vcvt.s32.f32 %v127
  %v272 = vcvt.s32.f32 %v128
  %v273 = vcvt.s32.f32 %v129
  %v274 = vcvt.s32.f32 %v130
  %v275 = vcvt.s32.f32 %v131
  %v276 = vcvt.s32.f32 %v132
  %v277 = vcvt.s32.f32 %v133
  %v278 = vcvt.s32.f32 %v134
  %v279 = vcvt.s32.f32 %v135
  %v280 = vcvt.s32.f32 %v136
  %v281 = vcvt.s32.f32 %v137
  %v282 = vcvt.s32.f32 %v138
  %v283 = vcvt.s32.f32 %v139
  %v284 = vcvt.s32.f32 %v140
  %v285 = vcvt.s32.f32 %v141
  %v286 = vcvt.s32.f32 %v142
  %v287 = vcvt.s32.f32 %v143
  %v288 = vcvt.s32.f32 %v144
  %v289 = vcvt.s32.f32 %v145
  %v290 = vcvt.s32.f32 %v146
  %v291 = vcvt.s32.f32 %v147
  %v292 = vcvt.s32.f32 %v148
  %v293 = vcvt.s32.f32 %v149
  %v294 = vcvt.s32.f32 %v150
  %v295 = vcvt.s32.f32 %v151
  %v296 = vcvt.s32.f32 %v152
  %v297 = vcvt.s32.f32 %v153
  %v298 = vcvt.s32.f32 %v154
  %v299 = vcvt.s32.f32 %v155
  %v300 = vcvt.s32.f32 %v156
  %v301 = vcvt.s32.f32 %v157
  %v302 = vcvt.s32.f32 %v158
  %v303 = vcvt.s32.f32 %v159
  %v304 = vcvt.s32.f32 %v160
  %v305 = vcvt.s32.f32 %v161
  %v306 = vcvt.s32.f32 %v162
  %v307 = vcvt.s32.f32 %v163
  %v308 = vcvt.s32.f32 %v164
  %v309 = vcvt.s32.f32 %v165
  %v310 = vcvt.s32.f32 %v166
  %v311 = vcvt.s32.f32 %v167
  %v312 = vcvt.s32.f32 %v168
  %v313 = vcvt.s32.f32 %v169
  %v314 = vcvt.s32.f32 %v170
  %v315 = vcvt.s32.f32 %v171
  %v316 = vcvt.s32.f32 %v172
  %v317 = vcvt.s32.f32 %v173
  %v318 = vcvt.s32.f32 %v174
  %v319 = vcvt.s32.f32 %v175
  %v320 = vcvt.s32.f32 %v176
  %v321 = vcvt.s32.f32 %v177
  %v322 = vcvt.s32.f32 %v178
  %v323 = vcvt.s32.f32 %v179
  %v324 = vcvt.s32.f32 %v180
  %v325 = vcvt.s32.f32 %v181
  %v326 = vcvt.s32.f32 %v182
  %v327 = vcvt.s32.f32 %v183
  %v328 = vcvt.s32.f32 %v184
  %v329 = vcvt.s32.f32 %v185
  %v330 = vcvt.s32.f32 %v186
  %v331 = vcvt.s32.f32 %v187
  %v332 = vcvt.s32.f32 %v188
  %v333 = vcvt.s32.f32 %v189
  %v334 = vcvt.s32.f32 %v190
  %v335 = vcvt.s32.f32 %v191
  %v336 = vcvt.s32.f32 %v192
  %v337 = vcvt.s32.f32 %v193
  %v338 = vcvt.s32.f32 %v194
  %v339 = vcvt.s32.f32 %v195
  %v340 = vcvt.s32.f32 %v196
  %v341 = vcvt.s32.f32 %v197
  %v342 = vcvt.s32.f32 %v198
  %v343 = vcvt.s32.f32 %v199
  %v344 = vcvt.s32.f32 %v200
  %v345 = vcvt.s32.f32 %v201
  %v346 = vcvt.s32.f32 %v202
  %v347 = vcvt.s32.f32 %v203
  %v348 = vcvt.s32.f32 %v204
  %v349 = vcvt.s32.f32 %v205
  %v350 = vcvt.s32.f32 %v206
  %v351 = vcvt.s32.f32 %v207
  %v352 = vcvt.s32.f32 %v208
  %v353 = vcvt.s32.f32 %v209
  %v354 = vcvt.s32.f32 %v210
  %v355 = vcvt.s32.f32 %v211
  %v356 = vcvt.s32.f32 %v212
  %v357 = vcvt.s32.f32 %v213
  %v358 = vcvt.s32.f32 %v214
  %v359 = vcvt.s32.f32 %v215
  %v360 = vcvt.s32.f32 %v216
  %v361 = vcvt.s32.f32 %v217
  %v362 = vcvt.s32.f32 %v218
  %v363 = vcvt.s32.f32 %v219
  %v364 = vcvt.s32.f32 %v220
  %v365 = vcvt.s32.f32 %v221
  %v366 = vcvt.s32.f32 %v222
  %v367 = vcvt.s32.f32 %v223
  %v368 = vcvt.s32.f32 %v224
  %v369 = vcvt.s32.f32 %v225
  %v370 = vcvt.s32.f32 %v226
  %v371 = vcvt.s32.f32 %v227
  %v372 = vcvt.s32.f32 %v228
  %v373 = vcvt.s32.f32 %v229
  %v374 = vcvt.s32.f32 %v230
  %v375 = vcvt.s32.f32 %v231
  %v376 = vcvt.s32.f32 %v232
  %v377 = vcvt.s32.f32 %v233
  %v378 = vcvt.s32.f32 %v234
  %v379 = vcvt.s32.f32 %v235
  %v380 = vcvt.s32.f32 %v236
  %v381 = vcvt.s32.f32 %v237
  %v382 = vcvt.s32.f32 %v238
  %v383 = vcvt.s32.f32 %v239
  %v384 = vcvt.s32.f32 %v240
  %v385 = vcvt.s32.f32 %v241
  %v386 = vcvt.s32.f32 %v242
  %v387 = vcvt.s32.f32 %v243
  %v388 = vcvt.s32.f32 %v244
  %v389 = vcvt.s32.f32 %v245
  %v390 = vcvt.s32.f32 %v246
  %v391 = vcvt.s32.f32 %v247
  %v392 = vcvt.s32.f32 %v248
  %v393 = vcvt.s32.f32 %v249
  %v394 = vcvt.s32.f32 %v250
  %v395 = vcvt.s32.f32 %v251
  %v396 = vcvt.s32.f32 %v252
  %v397 = vcvt.s32.f32 %v253
  %v398 = vcvt.s32.f32 %v254
  %v399 = vcvt.s32.f32 %v255
  %v400 = vcvt.s32.f32 %v256
  %v401 = vcvt.s32.f32 %v257
  %v402 = vcvt.s32.f32 %v258
  %v403 = vcvt.s32.f32 %v259
  %v404 = vcvt.s32.f32 %v260
  %v405 = vcvt.s32.f32 %v261
  %v406 = vcvt.s32.f32 %v262
  %v407 = vcvt.s32.f32 %v263
  %v408 = vpack.c.bf16 %v266, %v264
  %v409 = vpack.c.bf16 %v267, %v265
  %v410 = vpack.c.bf16 %v270, %v268
  %v411 = vpack.c.bf16 %v271, %v269
  %v412 = vpack.c.bf16 %v274, %v272
  %v413 = vpack.c.bf16 %v275, %v273
  %v414 = vpack.c.bf16 %v278, %v276
  %v415 = vpack.c.bf16 %v279, %v277
  %v416 = vpack.c.bf16 %v282, %v280
  %v417 = vpack.c.bf16 %v283, %v281
  %v418 = vpack.c.bf16 %v286, %v284
  %v419 = vpack.c.bf16 %v287, %v285
  %v420 = vpack.c.bf16 %v290, %v288
  %v421 = vpack.c.bf16 %v291, %v289
  %v422 = vpack.c.bf16 %v294, %v292
  %v423 = vpack.c.bf16 %v295, %v293
  %v424 = vpack.c.bf16 %v298, %v296
  %v425 = vpack.c.bf16 %v299, %v297
  %v426 = vpack.c.bf16 %v302, %v300
  %v427 = vpack.c.bf16 %v303, %v301
  %v428 = vpack.c.bf16 %v306, %v304
  %v429 = vpack.c.bf16 %v307, %v305
  %v430 = vpack.c.bf16 %v310, %v308
  %v431 = vpack.c.bf16 %v311, %v309
  %v432 = vpack.c.bf16 %v314, %v312
  %v433 = vpack.c.bf16 %v315, %v313
  %v434 = vpack.c.bf16 %v318, %v316
  %v435 = vpack.c.bf16 %v319, %v317
  %v436 = vpack.c.bf16 %v322, %v320
  %v437 = vpack.c.bf16 %v323, %v321
  %v438 = vpack.c.bf16 %v326, %v324
  %v439 = vpack.c.bf16 %v327, %v325
  %v440 = vpack.c.bf16 %v330, %v328
  %v441 = vpack.c.bf16 %v331, %v329
  %v442 = vpack.c.bf16 %v334, %v332
  %v443 = vpack.c.bf16 %v335, %v333
  %v444 = vpack.c.bf16 %v338, %v336
  %v445 = vpack.c.bf16 %v339, %v337
  %v446 = vpack.c.bf16 %v342, %v340
  %v447 = vpack.c.bf16 %v343, %v341
  %v448 = vpack.c.bf16 %v346, %v344
  %v449 = vpack.c.bf16 %v347, %v345
  %v450 = vpack.c.bf16 %v350, %v348
  %v451 = vpack.c.bf16 %v351, %v349
  %v452 = vpack.c.bf16 %v354, %v352
  %v453 = vpack.c.bf16 %v355, %v353
  %v454 = vpack.c.bf16 %v358, %v356
  %v455 = vpack.c.bf16 %v359, %v357
  %v456 = vpack.c.bf16 %v362, %v360
  %v457 = vpack.c.bf16 %v363, %v361
  %v458 = vpack.c.bf16 %v366, %v364
  %v459 = vpack.c.bf16 %v367, %v365
  %v460 = vpack.c.bf16 %v370, %v368
  %v461 = vpack.c.bf16 %v371, %v369
  %v462 = vpack.c.bf16 %v374, %v372
  %v463 = vpack.c.bf16 %v375, %v373
  %v464 = vpack.c.bf16 %v378, %v376
  %v465 = vpack.c.bf16 %v379, %v377
  %v466 = vpack.c.bf16 %v382, %v380
  %v467 = vpack.c.bf16 %v383, %v381
  %v468 = vpack.c.bf16 %v386, %v384
  %v469 = vpack.c.bf16 %v387, %v385
  %v470 = vpack.c.bf16 %v390, %v388
  %v471 = vpack.c.bf16 %v391, %v389
  %v472 = vpack.c.bf16 %v394, %v392
  %v473 = vpack.c.bf16 %v395, %v393
  %v474 = vpack.c.bf16 %v398, %v396
  %v475 = vpack.c.bf16 %v399, %v397
  %v476 = vpack.c.bf16 %v402, %v400
  %v477 = vpack.c.bf16 %v403, %v401
  %v478 = vpack.c.bf16 %v406, %v404
  %v479 = vpack.c.bf16 %v407, %v405
  %vm480 = vcmask 130048
  %v482 = vsel %vm480, %v409, 0
  %v485 = vsel %vm480, %v411, 0
  %v488 = vsel %vm480, %v413, 0
  %v491 = vsel %vm480, %v415, 0
  %v494 = vsel %vm480, %v417, 0
  %v497 = vsel %vm480, %v419, 0
  %v500 = vsel %vm480, %v421, 0
  %v503 = vsel %vm480, %v423, 0
  %v506 = vsel %vm480, %v425, 0
  %v509 = vsel %vm480, %v427, 0
  %v512 = vsel %vm480, %v429, 0
  %v515 = vsel %vm480, %v431, 0
  %v518 = vsel %vm480, %v433, 0
  %v521 = vsel %vm480, %v435, 0
  %v524 = vsel %vm480, %v437, 0
  %v527 = vsel %vm480, %v439, 0
  %v530 = vsel %vm480, %v441, 0
  %v533 = vsel %vm480, %v443, 0
  %v536 = vsel %vm480, %v445, 0
  %v539 = vsel %vm480, %v447, 0
  %v542 = vsel %vm480, %v449, 0
  %v545 = vsel %vm480, %v451, 0
  %v548 = vsel %vm480, %v453, 0
  %v551 = vsel %vm480, %v455, 0
  %v554 = vsel %vm480, %v457, 0
  %v557 = vsel %vm480, %v459, 0
  %v560 = vsel %vm480, %v461, 0
  %v563 = vsel %vm480, %v463, 0
  %v566 = vsel %vm480, %v465, 0
  %v569 = vsel %vm480, %v467, 0
  %v572 = vsel %vm480, %v469, 0
  %v575 = vsel %vm480, %v471, 0
  %v578 = vsel %vm480, %v473, 0
  %v581 = vsel %vm480, %v475, 0
  %v584 = vsel %vm480, %v477, 0
  %v587 = vsel %vm480, %v479, 0
  %589 = vmatpush.bf16.msra.mxu0 %v82
  %590 = vmatpush.bf16.msra.mxu0 %v81
  %591 = vmatpush.bf16.msra.mxu0 %v80
  %592 = vmatpush.bf16.msra.mxu0 %v79
  %593 = vmatpush.bf16.msra.mxu0 %v78
  %594 = vmatpush.bf16.msra.mxu0 %v77
  %595 = vmatpush.bf16.msra.mxu0 %v76
  %596 = vmatpush.bf16.msra.mxu0 %v75
  %597 = vmatmul.bf16.gmra.mxu0 %v408
  %v598 = vpop.f32.mrf.mxu0
  %v599 = vadd.f32 0.0, %v598
  %v600 = vpop.f32.mrf.mxu0
  %v601 = vadd.f32 0.0, %v600
  %602 = vmatmul.bf16.gmra.mxu0 %v410
  %v603 = vpop.f32.mrf.mxu0
  %v604 = vadd.f32 0.0, %v603
  %v605 = vpop.f32.mrf.mxu0
  %v606 = vadd.f32 0.0, %v605
  %607 = vmatmul.bf16.gmra.mxu0 %v412
  %v608 = vpop.f32.mrf.mxu0
  %v609 = vadd.f32 0.0, %v608
  %v610 = vpop.f32.mrf.mxu0
  %v611 = vadd.f32 0.0, %v610
  %612 = vmatmul.bf16.gmra.mxu0 %v414
  %v613 = vpop.f32.mrf.mxu0
  %v614 = vadd.f32 0.0, %v613
  %v615 = vpop.f32.mrf.mxu0
  %v616 = vadd.f32 0.0, %v615
  %617 = vmatmul.bf16.gmra.mxu0 %v416
  %v618 = vpop.f32.mrf.mxu0
  %v619 = vadd.f32 0.0, %v618
  %v620 = vpop.f32.mrf.mxu0
  %v621 = vadd.f32 0.0, %v620
  %622 = vmatmul.bf16.gmra.mxu0 %v418
  %v623 = vpop.f32.mrf.mxu0
  %v624 = vadd.f32 0.0, %v623
  %v625 = vpop.f32.mrf.mxu0
  %v626 = vadd.f32 0.0, %v625
  %627 = vmatmul.bf16.gmra.mxu0 %v420
  %v628 = vpop.f32.mrf.mxu0
  %v629 = vadd.f32 0.0, %v628
  %v630 = vpop.f32.mrf.mxu0
  %v631 = vadd.f32 0.0, %v630
  %632 = vmatmul.bf16.gmra.mxu0 %v422
  %v633 = vpop.f32.mrf.mxu0
  %v634 = vadd.f32 0.0, %v633
  %v635 = vpop.f32.mrf.mxu0
  %v636 = vadd.f32 0.0, %v635
  %637 = vmatmul.bf16.gmra.mxu0 %v424
  %v638 = vpop.f32.mrf.mxu0
  %v639 = vadd.f32 0.0, %v638
  %v640 = vpop.f32.mrf.mxu0
  %v641 = vadd.f32 0.0, %v640
  %642 = vmatmul.bf16.gmra.mxu0 %v426
  %v643 = vpop.f32.mrf.mxu0
  %v644 = vadd.f32 0.0, %v643
  %v645 = vpop.f32.mrf.mxu0
  %v646 = vadd.f32 0.0, %v645
  %647 = vmatmul.bf16.gmra.mxu0 %v428
  %v648 = vpop.f32.mrf.mxu0
  %v649 = vadd.f32 0.0, %v648
  %v650 = vpop.f32.mrf.mxu0
  %v651 = vadd.f32 0.0, %v650
  %652 = vmatmul.bf16.gmra.mxu0 %v430
  %v653 = vpop.f32.mrf.mxu0
  %v654 = vadd.f32 0.0, %v653
  %v655 = vpop.f32.mrf.mxu0
  %v656 = vadd.f32 0.0, %v655
  %657 = vmatmul.bf16.gmra.mxu0 %v432
  %v658 = vpop.f32.mrf.mxu0
  %v659 = vadd.f32 0.0, %v658
  %v660 = vpop.f32.mrf.mxu0
  %v661 = vadd.f32 0.0, %v660
  %662 = vmatmul.bf16.gmra.mxu0 %v434
  %v663 = vpop.f32.mrf.mxu0
  %v664 = vadd.f32 0.0, %v663
  %v665 = vpop.f32.mrf.mxu0
  %v666 = vadd.f32 0.0, %v665
  %667 = vmatmul.bf16.gmra.mxu0 %v436
  %v668 = vpop.f32.mrf.mxu0
  %v669 = vadd.f32 0.0, %v668
  %v670 = vpop.f32.mrf.mxu0
  %v671 = vadd.f32 0.0, %v670
  %672 = vmatmul.bf16.gmra.mxu0 %v438
  %v673 = vpop.f32.mrf.mxu0
  %v674 = vadd.f32 0.0, %v673
  %v675 = vpop.f32.mrf.mxu0
  %v676 = vadd.f32 0.0, %v675
  %677 = vmatmul.bf16.gmra.mxu0 %v440
  %v678 = vpop.f32.mrf.mxu0
  %v679 = vadd.f32 0.0, %v678
  %v680 = vpop.f32.mrf.mxu0
  %v681 = vadd.f32 0.0, %v680
  %682 = vmatmul.bf16.gmra.mxu0 %v442
  %v683 = vpop.f32.mrf.mxu0
  %v684 = vadd.f32 0.0, %v683
  %v685 = vpop.f32.mrf.mxu0
  %v686 = vadd.f32 0.0, %v685
  %687 = vmatmul.bf16.gmra.mxu0 %v444
  %v688 = vpop.f32.mrf.mxu0
  %v689 = vadd.f32 0.0, %v688
  %v690 = vpop.f32.mrf.mxu0
  %v691 = vadd.f32 0.0, %v690
  %692 = vmatmul.bf16.gmra.mxu0 %v446
  %v693 = vpop.f32.mrf.mxu0
  %v694 = vadd.f32 0.0, %v693
  %v695 = vpop.f32.mrf.mxu0
  %v696 = vadd.f32 0.0, %v695
  %697 = vmatmul.bf16.gmra.mxu0 %v448
  %v698 = vpop.f32.mrf.mxu0
  %v699 = vadd.f32 0.0, %v698
  %v700 = vpop.f32.mrf.mxu0
  %v701 = vadd.f32 0.0, %v700
  %702 = vmatmul.bf16.gmra.mxu0 %v450
  %v703 = vpop.f32.mrf.mxu0
  %v704 = vadd.f32 0.0, %v703
  %v705 = vpop.f32.mrf.mxu0
  %v706 = vadd.f32 0.0, %v705
  %707 = vmatmul.bf16.gmra.mxu0 %v452
  %v708 = vpop.f32.mrf.mxu0
  %v709 = vadd.f32 0.0, %v708
  %v710 = vpop.f32.mrf.mxu0
  %v711 = vadd.f32 0.0, %v710
  %712 = vmatmul.bf16.gmra.mxu0 %v454
  %v713 = vpop.f32.mrf.mxu0
  %v714 = vadd.f32 0.0, %v713
  %v715 = vpop.f32.mrf.mxu0
  %v716 = vadd.f32 0.0, %v715
  %717 = vmatmul.bf16.gmra.mxu0 %v456
  %v718 = vpop.f32.mrf.mxu0
  %v719 = vadd.f32 0.0, %v718
  %v720 = vpop.f32.mrf.mxu0
  %v721 = vadd.f32 0.0, %v720
  %722 = vmatmul.bf16.gmra.mxu0 %v458
  %v723 = vpop.f32.mrf.mxu0
  %v724 = vadd.f32 0.0, %v723
  %v725 = vpop.f32.mrf.mxu0
  %v726 = vadd.f32 0.0, %v725
  %727 = vmatmul.bf16.gmra.mxu0 %v460
  %v728 = vpop.f32.mrf.mxu0
  %v729 = vadd.f32 0.0, %v728
  %v730 = vpop.f32.mrf.mxu0
  %v731 = vadd.f32 0.0, %v730
  %732 = vmatmul.bf16.gmra.mxu0 %v462
  %v733 = vpop.f32.mrf.mxu0
  %v734 = vadd.f32 0.0, %v733
  %v735 = vpop.f32.mrf.mxu0
  %v736 = vadd.f32 0.0, %v735
  %737 = vmatmul.bf16.gmra.mxu0 %v464
  %v738 = vpop.f32.mrf.mxu0
  %v739 = vadd.f32 0.0, %v738
  %v740 = vpop.f32.mrf.mxu0
  %v741 = vadd.f32 0.0, %v740
  %742 = vmatmul.bf16.gmra.mxu0 %v466
  %v743 = vpop.f32.mrf.mxu0
  %v744 = vadd.f32 0.0, %v743
  %v745 = vpop.f32.mrf.mxu0
  %v746 = vadd.f32 0.0, %v745
  %747 = vmatmul.bf16.gmra.mxu0 %v468
  %v748 = vpop.f32.mrf.mxu0
  %v749 = vadd.f32 0.0, %v748
  %v750 = vpop.f32.mrf.mxu0
  %v751 = vadd.f32 0.0, %v750
  %752 = vmatmul.bf16.gmra.mxu0 %v470
  %v753 = vpop.f32.mrf.mxu0
  %v754 = vadd.f32 0.0, %v753
  %v755 = vpop.f32.mrf.mxu0
  %v756 = vadd.f32 0.0, %v755
  %757 = vmatmul.bf16.gmra.mxu0 %v472
  %v758 = vpop.f32.mrf.mxu0
  %v759 = vadd.f32 0.0, %v758
  %v760 = vpop.f32.mrf.mxu0
  %v761 = vadd.f32 0.0, %v760
  %762 = vmatmul.bf16.gmra.mxu0 %v474
  %v763 = vpop.f32.mrf.mxu0
  %v764 = vadd.f32 0.0, %v763
  %v765 = vpop.f32.mrf.mxu0
  %v766 = vadd.f32 0.0, %v765
  %767 = vmatmul.bf16.gmra.mxu0 %v476
  %v768 = vpop.f32.mrf.mxu0
  %v769 = vadd.f32 0.0, %v768
  %v770 = vpop.f32.mrf.mxu0
  %v771 = vadd.f32 0.0, %v770
  %772 = vmatmul.bf16.gmra.mxu0 %v478
  %v773 = vpop.f32.mrf.mxu0
  %v774 = vadd.f32 0.0, %v773
  %v775 = vpop.f32.mrf.mxu0
  %v776 = vadd.f32 0.0, %v775
  %777 = vdwg.mxu0
  %778 = vmatpush.bf16.msra.mxu0 0
  %779 = vmatpush.bf16.msra.mxu0 0
  %780 = vmatpush.bf16.msra.mxu0 0
  %781 = vmatpush.bf16.msra.mxu0 0
  %782 = vmatpush.bf16.msra.mxu0 0
  %783 = vmatpush.bf16.msra.mxu0 0
  %784 = vmatpush.bf16.msra.mxu0 0
  %785 = vmatpush.bf16.msra.mxu0 %v83
  %786 = vmatmul.bf16.gmra.mxu0 %v482
  %v787 = vpop.f32.mrf.mxu0
  %v788 = vadd.f32 %v599, %v787
  %v789 = vpop.f32.mrf.mxu0
  %v790 = vadd.f32 %v601, %v789
  %791 = vmatmul.bf16.gmra.mxu0 %v485
  %v792 = vpop.f32.mrf.mxu0
  %v793 = vadd.f32 %v604, %v792
  %v794 = vpop.f32.mrf.mxu0
  %v795 = vadd.f32 %v606, %v794
  %796 = vmatmul.bf16.gmra.mxu0 %v488
  %v797 = vpop.f32.mrf.mxu0
  %v798 = vadd.f32 %v609, %v797
  %v799 = vpop.f32.mrf.mxu0
  %v800 = vadd.f32 %v611, %v799
  %801 = vmatmul.bf16.gmra.mxu0 %v491
  %v802 = vpop.f32.mrf.mxu0
  %v803 = vadd.f32 %v614, %v802
  %v804 = vpop.f32.mrf.mxu0
  %v805 = vadd.f32 %v616, %v804
  %806 = vmatmul.bf16.gmra.mxu0 %v494
  %v807 = vpop.f32.mrf.mxu0
  %v808 = vadd.f32 %v619, %v807
  %v809 = vpop.f32.mrf.mxu0
  %v810 = vadd.f32 %v621, %v809
  %811 = vmatmul.bf16.gmra.mxu0 %v497
  %v812 = vpop.f32.mrf.mxu0
  %v813 = vadd.f32 %v624, %v812
  %v814 = vpop.f32.mrf.mxu0
  %v815 = vadd.f32 %v626, %v814
  %816 = vmatmul.bf16.gmra.mxu0 %v500
  %v817 = vpop.f32.mrf.mxu0
  %v818 = vadd.f32 %v629, %v817
  %v819 = vpop.f32.mrf.mxu0
  %v820 = vadd.f32 %v631, %v819
  %821 = vmatmul.bf16.gmra.mxu0 %v503
  %v822 = vpop.f32.mrf.mxu0
  %v823 = vadd.f32 %v634, %v822
  %v824 = vpop.f32.mrf.mxu0
  %v825 = vadd.f32 %v636, %v824
  %826 = vmatmul.bf16.gmra.mxu0 %v506
  %v827 = vpop.f32.mrf.mxu0
  %v828 = vadd.f32 %v639, %v827
  %v829 = vpop.f32.mrf.mxu0
  %v830 = vadd.f32 %v641, %v829
  %831 = vmatmul.bf16.gmra.mxu0 %v509
  %v832 = vpop.f32.mrf.mxu0
  %v833 = vadd.f32 %v644, %v832
  %v834 = vpop.f32.mrf.mxu0
  %v835 = vadd.f32 %v646, %v834
  %836 = vmatmul.bf16.gmra.mxu0 %v512
  %v837 = vpop.f32.mrf.mxu0
  %v838 = vadd.f32 %v649, %v837
  %v839 = vpop.f32.mrf.mxu0
  %v840 = vadd.f32 %v651, %v839
  %841 = vmatmul.bf16.gmra.mxu0 %v515
  %v842 = vpop.f32.mrf.mxu0
  %v843 = vadd.f32 %v654, %v842
  %v844 = vpop.f32.mrf.mxu0
  %v845 = vadd.f32 %v656, %v844
  %846 = vmatmul.bf16.gmra.mxu0 %v518
  %v847 = vpop.f32.mrf.mxu0
  %v848 = vadd.f32 %v659, %v847
  %v849 = vpop.f32.mrf.mxu0
  %v850 = vadd.f32 %v661, %v849
  %851 = vmatmul.bf16.gmra.mxu0 %v521
  %v852 = vpop.f32.mrf.mxu0
  %v853 = vadd.f32 %v664, %v852
  %v854 = vpop.f32.mrf.mxu0
  %v855 = vadd.f32 %v666, %v854
  %856 = vmatmul.bf16.gmra.mxu0 %v524
  %v857 = vpop.f32.mrf.mxu0
  %v858 = vadd.f32 %v669, %v857
  %v859 = vpop.f32.mrf.mxu0
  %v860 = vadd.f32 %v671, %v859
  %861 = vmatmul.bf16.gmra.mxu0 %v527
  %v862 = vpop.f32.mrf.mxu0
  %v863 = vadd.f32 %v674, %v862
  %v864 = vpop.f32.mrf.mxu0
  %v865 = vadd.f32 %v676, %v864
  %866 = vmatmul.bf16.gmra.mxu0 %v530
  %v867 = vpop.f32.mrf.mxu0
  %v868 = vadd.f32 %v679, %v867
  %v869 = vpop.f32.mrf.mxu0
  %v870 = vadd.f32 %v681, %v869
  %871 = vmatmul.bf16.gmra.mxu0 %v533
  %v872 = vpop.f32.mrf.mxu0
  %v873 = vadd.f32 %v684, %v872
  %v874 = vpop.f32.mrf.mxu0
  %v875 = vadd.f32 %v686, %v874
  %876 = vmatmul.bf16.gmra.mxu0 %v536
  %v877 = vpop.f32.mrf.mxu0
  %v878 = vadd.f32 %v689, %v877
  %v879 = vpop.f32.mrf.mxu0
  %v880 = vadd.f32 %v691, %v879
  %881 = vmatmul.bf16.gmra.mxu0 %v539
  %v882 = vpop.f32.mrf.mxu0
  %v883 = vadd.f32 %v694, %v882
  %v884 = vpop.f32.mrf.mxu0
  %v885 = vadd.f32 %v696, %v884
  %886 = vmatmul.bf16.gmra.mxu0 %v542
  %v887 = vpop.f32.mrf.mxu0
  %v888 = vadd.f32 %v699, %v887
  %v889 = vpop.f32.mrf.mxu0
  %v890 = vadd.f32 %v701, %v889
  %891 = vmatmul.bf16.gmra.mxu0 %v545
  %v892 = vpop.f32.mrf.mxu0
  %v893 = vadd.f32 %v704, %v892
  %v894 = vpop.f32.mrf.mxu0
  %v895 = vadd.f32 %v706, %v894
  %896 = vmatmul.bf16.gmra.mxu0 %v548
  %v897 = vpop.f32.mrf.mxu0
  %v898 = vadd.f32 %v709, %v897
  %v899 = vpop.f32.mrf.mxu0
  %v900 = vadd.f32 %v711, %v899
  %901 = vmatmul.bf16.gmra.mxu0 %v551
  %v902 = vpop.f32.mrf.mxu0
  %v903 = vadd.f32 %v714, %v902
  %v904 = vpop.f32.mrf.mxu0
  %v905 = vadd.f32 %v716, %v904
  %906 = vmatmul.bf16.gmra.mxu0 %v554
  %v907 = vpop.f32.mrf.mxu0
  %v908 = vadd.f32 %v719, %v907
  %v909 = vpop.f32.mrf.mxu0
  %v910 = vadd.f32 %v721, %v909
  %911 = vmatmul.bf16.gmra.mxu0 %v557
  %v912 = vpop.f32.mrf.mxu0
  %v913 = vadd.f32 %v724, %v912
  %v914 = vpop.f32.mrf.mxu0
  %v915 = vadd.f32 %v726, %v914
  %916 = vmatmul.bf16.gmra.mxu0 %v560
  %v917 = vpop.f32.mrf.mxu0
  %v918 = vadd.f32 %v729, %v917
  %v919 = vpop.f32.mrf.mxu0
  %v920 = vadd.f32 %v731, %v919
  %921 = vmatmul.bf16.gmra.mxu0 %v563
  %v922 = vpop.f32.mrf.mxu0
  %v923 = vadd.f32 %v734, %v922
  %v924 = vpop.f32.mrf.mxu0
  %v925 = vadd.f32 %v736, %v924
  %926 = vmatmul.bf16.gmra.mxu0 %v566
  %v927 = vpop.f32.mrf.mxu0
  %v928 = vadd.f32 %v739, %v927
  %v929 = vpop.f32.mrf.mxu0
  %v930 = vadd.f32 %v741, %v929
  %931 = vmatmul.bf16.gmra.mxu0 %v569
  %v932 = vpop.f32.mrf.mxu0
  %v933 = vadd.f32 %v744, %v932
  %v934 = vpop.f32.mrf.mxu0
  %v935 = vadd.f32 %v746, %v934
  %936 = vmatmul.bf16.gmra.mxu0 %v572
  %v937 = vpop.f32.mrf.mxu0
  %v938 = vadd.f32 %v749, %v937
  %v939 = vpop.f32.mrf.mxu0
  %v940 = vadd.f32 %v751, %v939
  %941 = vmatmul.bf16.gmra.mxu0 %v575
  %v942 = vpop.f32.mrf.mxu0
  %v943 = vadd.f32 %v754, %v942
  %v944 = vpop.f32.mrf.mxu0
  %v945 = vadd.f32 %v756, %v944
  %946 = vmatmul.bf16.gmra.mxu0 %v578
  %v947 = vpop.f32.mrf.mxu0
  %v948 = vadd.f32 %v759, %v947
  %v949 = vpop.f32.mrf.mxu0
  %v950 = vadd.f32 %v761, %v949
  %951 = vmatmul.bf16.gmra.mxu0 %v581
  %v952 = vpop.f32.mrf.mxu0
  %v953 = vadd.f32 %v764, %v952
  %v954 = vpop.f32.mrf.mxu0
  %v955 = vadd.f32 %v766, %v954
  %956 = vmatmul.bf16.gmra.mxu0 %v584
  %v957 = vpop.f32.mrf.mxu0
  %v958 = vadd.f32 %v769, %v957
  %v959 = vpop.f32.mrf.mxu0
  %v960 = vadd.f32 %v771, %v959
  %961 = vmatmul.bf16.gmra.mxu0 %v587
  %v962 = vpop.f32.mrf.mxu0
  %v963 = vadd.f32 %v774, %v962
  %v964 = vpop.f32.mrf.mxu0
  %v965 = vadd.f32 %v776, %v964
  %966 = vdwg.mxu0
  %v967 = vld [vmem:[%s2] sm:$0xff]
  %v968 = vld [vmem:[%s2 + $0x8] sm:$0xff]
  %v969 = vld [vmem:[%s2 + $0x10] sm:$0xff]
  %v970 = vld [vmem:[%s2 + $0x18] sm:$0xff]
  %v971 = vld [vmem:[%s2 + $0x20] sm:$0xff]
  %v972 = vld [vmem:[%s2 + $0x28] sm:$0xff]
  %v973 = vld [vmem:[%s2 + $0x30] sm:$0xff]
  %v974 = vld [vmem:[%s2 + $0x38] sm:$0xff]
  %v975 = vld [vmem:[%s2 + $0x40] sm:$0xff]
  %v976 = vld [vmem:[%s2 + $0x48] sm:$0xff]
  %v977 = vld [vmem:[%s2 + $0x50] sm:$0xff]
  %v978 = vld [vmem:[%s2 + $0x58] sm:$0xff]
  %v979 = vld [vmem:[%s2 + $0x60] sm:$0xff]
  %v980 = vld [vmem:[%s2 + $0x68] sm:$0xff]
  %v981 = vld [vmem:[%s2 + $0x70] sm:$0xff]
  %v982 = vld [vmem:[%s2 + $0x78] sm:$0xff]
  %v983 = vld [vmem:[%s2 + $0x80] sm:$0xff]
  %v984 = vld [vmem:[%s2 + $0x88] sm:$0xff]
  %v985 = vld [vmem:[%s2 + $0x90] sm:$0xff]
  %v986 = vld [vmem:[%s2 + $0x98] sm:$0xff]
  %v987 = vld [vmem:[%s2 + $0xa0] sm:$0xff]
  %v988 = vld [vmem:[%s2 + $0xa8] sm:$0xff]
  %v989 = vld [vmem:[%s2 + $0xb0] sm:$0xff]
  %v990 = vld [vmem:[%s2 + $0xb8] sm:$0xff]
  %v991 = vld [vmem:[%s2 + $0xc0] sm:$0xff]
  %v992 = vld [vmem:[%s2 + $0xc8] sm:$0xff]
  %v993 = vld [vmem:[%s2 + $0xd0] sm:$0xff]
  %v994 = vld [vmem:[%s2 + $0xd8] sm:$0xff]
  %v995 = vld [vmem:[%s2 + $0xe0] sm:$0xff]
  %v996 = vld [vmem:[%s2 + $0xe8] sm:$0xff]
  %v997 = vld [vmem:[%s2 + $0xf0] sm:$0xff]
  %v998 = vld [vmem:[%s2 + $0xf8] sm:$0xff]
  %v999 = vld [vmem:[%s2 + $0x100] sm:$0xff]
  %v1000 = vld [vmem:[%s2 + $0x108] sm:$0xff]
  %v1001 = vld [vmem:[%s2 + $0x110] sm:$0xff]
  %v1002 = vld [vmem:[%s2 + $0x118] sm:$0xff]
  %v1003 = vld [vmem:[%s2 + $0x120] sm:$0xff]
  %v1004 = vld [vmem:[%s2 + $0x128] sm:$0xff]
  %v1005 = vld [vmem:[%s2 + $0x130] sm:$0xff]
  %v1006 = vld [vmem:[%s2 + $0x138] sm:$0xff]
  %v1007 = vld [vmem:[%s2 + $0x140] sm:$0xff]
  %v1008 = vld [vmem:[%s2 + $0x148] sm:$0xff]
  %v1009 = vld [vmem:[%s2 + $0x150] sm:$0xff]
  %v1010 = vld [vmem:[%s2 + $0x158] sm:$0xff]
  %v1011 = vld [vmem:[%s2 + $0x160] sm:$0xff]
  %v1012 = vld [vmem:[%s2 + $0x168] sm:$0xff]
  %v1013 = vld [vmem:[%s2 + $0x170] sm:$0xff]
  %v1014 = vld [vmem:[%s2 + $0x178] sm:$0xff]
  %v1015 = vld [vmem:[%s2 + $0x180] sm:$0xff]
  %v1016 = vld [vmem:[%s2 + $0x188] sm:$0xff]
  %v1017 = vld [vmem:[%s2 + $0x190] sm:$0xff]
  %v1018 = vld [vmem:[%s2 + $0x198] sm:$0xff]
  %v1019 = vld [vmem:[%s2 + $0x1a0] sm:$0xff]
  %v1020 = vld [vmem:[%s2 + $0x1a8] sm:$0xff]
  %v1021 = vld [vmem:[%s2 + $0x1b0] sm:$0xff]
  %v1022 = vld [vmem:[%s2 + $0x1b8] sm:$0xff]
  %v1023 = vld [vmem:[%s2 + $0x1c0] sm:$0xff]
  %v1024 = vld [vmem:[%s2 + $0x1c8] sm:$0xff]
  %v1025 = vld [vmem:[%s2 + $0x1d0] sm:$0xff]
  %v1026 = vld [vmem:[%s2 + $0x1d8] sm:$0xff]
  %v1027 = vld [vmem:[%s2 + $0x1e0] sm:$0xff]
  %v1028 = vld [vmem:[%s2 + $0x1e8] sm:$0xff]
  %v1029 = vld [vmem:[%s2 + $0x1f0] sm:$0xff]
  %v1030 = vld [vmem:[%s2 + $0x1f8] sm:$0xff]
  %v1031 = vld [vmem:[%s2 + $0x200] sm:$0xff]
  %v1032 = vld [vmem:[%s2 + $0x208] sm:$0xff]
  %v1033 = vld [vmem:[%s2 + $0x210] sm:$0xff]
  %v1034 = vld [vmem:[%s2 + $0x218] sm:$0xff]
  %v1035 = vld [vmem:[%s2 + $0x220] sm:$0xff]
  %v1036 = vld [vmem:[%s2 + $0x228] sm:$0xff]
  %v1037 = vld [vmem:[%s2 + $0x230] sm:$0xff]
  %v1038 = vld [vmem:[%s2 + $0x238] sm:$0xff]
  %v1039 = vmul.f32 %v788, %v967
  %v1040 = vmul.f32 %v790, %v968
  %v1041 = vmul.f32 %v793, %v969
  %v1042 = vmul.f32 %v795, %v970
  %v1043 = vmul.f32 %v798, %v971
  %v1044 = vmul.f32 %v800, %v972
  %v1045 = vmul.f32 %v803, %v973
  %v1046 = vmul.f32 %v805, %v974
  %v1047 = vmul.f32 %v808, %v975
  %v1048 = vmul.f32 %v810, %v976
  %v1049 = vmul.f32 %v813, %v977
  %v1050 = vmul.f32 %v815, %v978
  %v1051 = vmul.f32 %v818, %v979
  %v1052 = vmul.f32 %v820, %v980
  %v1053 = vmul.f32 %v823, %v981
  %v1054 = vmul.f32 %v825, %v982
  %v1055 = vmul.f32 %v828, %v983
  %v1056 = vmul.f32 %v830, %v984
  %v1057 = vmul.f32 %v833, %v985
  %v1058 = vmul.f32 %v835, %v986
  %v1059 = vmul.f32 %v838, %v987
  %v1060 = vmul.f32 %v840, %v988
  %v1061 = vmul.f32 %v843, %v989
  %v1062 = vmul.f32 %v845, %v990
  %v1063 = vmul.f32 %v848, %v991
  %v1064 = vmul.f32 %v850, %v992
  %v1065 = vmul.f32 %v853, %v993
  %v1066 = vmul.f32 %v855, %v994
  %v1067 = vmul.f32 %v858, %v995
  %v1068 = vmul.f32 %v860, %v996
  %v1069 = vmul.f32 %v863, %v997
  %v1070 = vmul.f32 %v865, %v998
  %v1071 = vmul.f32 %v868, %v999
  %v1072 = vmul.f32 %v870, %v1000
  %v1073 = vmul.f32 %v873, %v1001
  %v1074 = vmul.f32 %v875, %v1002
  %v1075 = vmul.f32 %v878, %v1003
  %v1076 = vmul.f32 %v880, %v1004
  %v1077 = vmul.f32 %v883, %v1005
  %v1078 = vmul.f32 %v885, %v1006
  %v1079 = vmul.f32 %v888, %v1007
  %v1080 = vmul.f32 %v890, %v1008
  %v1081 = vmul.f32 %v893, %v1009
  %v1082 = vmul.f32 %v895, %v1010
  %v1083 = vmul.f32 %v898, %v1011
  %v1084 = vmul.f32 %v900, %v1012
  %v1085 = vmul.f32 %v903, %v1013
  %v1086 = vmul.f32 %v905, %v1014
  %v1087 = vmul.f32 %v908, %v1015
  %v1088 = vmul.f32 %v910, %v1016
  %v1089 = vmul.f32 %v913, %v1017
  %v1090 = vmul.f32 %v915, %v1018
  %v1091 = vmul.f32 %v918, %v1019
  %v1092 = vmul.f32 %v920, %v1020
  %v1093 = vmul.f32 %v923, %v1021
  %v1094 = vmul.f32 %v925, %v1022
  %v1095 = vmul.f32 %v928, %v1023
  %v1096 = vmul.f32 %v930, %v1024
  %v1097 = vmul.f32 %v933, %v1025
  %v1098 = vmul.f32 %v935, %v1026
  %v1099 = vmul.f32 %v938, %v1027
  %v1100 = vmul.f32 %v940, %v1028
  %v1101 = vmul.f32 %v943, %v1029
  %v1102 = vmul.f32 %v945, %v1030
  %v1103 = vmul.f32 %v948, %v1031
  %v1104 = vmul.f32 %v950, %v1032
  %v1105 = vmul.f32 %v953, %v1033
  %v1106 = vmul.f32 %v955, %v1034
  %v1107 = vmul.f32 %v958, %v1035
  %v1108 = vmul.f32 %v960, %v1036
  %v1109 = vmul.f32 %v963, %v1037
  %v1110 = vmul.f32 %v965, %v1038
  %v1111 = vld [vmem:[%s3] sm:$0xff]
  %v1112 = vld [vmem:[%s3 + $0x8] sm:$0xff]
  %v1113 = vld [vmem:[%s3 + $0x10] sm:$0xff]
  %v1114 = vld [vmem:[%s3 + $0x18] sm:$0xff]
  %v1115 = vld [vmem:[%s3 + $0x20] sm:$0xff]
  %v1116 = vld [vmem:[%s3 + $0x28] sm:$0xff]
  %v1117 = vld [vmem:[%s3 + $0x30] sm:$0xff]
  %v1118 = vld [vmem:[%s3 + $0x38] sm:$0xff]
  %v1119 = vld [vmem:[%s3 + $0x40] sm:$0xff]
  %v1120 = vld [vmem:[%s3 + $0x48] sm:$0xff]
  %v1121 = vld [vmem:[%s3 + $0x50] sm:$0xff]
  %v1122 = vld [vmem:[%s3 + $0x58] sm:$0xff]
  %v1123 = vld [vmem:[%s3 + $0x60] sm:$0xff]
  %v1124 = vld [vmem:[%s3 + $0x68] sm:$0xff]
  %v1125 = vld [vmem:[%s3 + $0x70] sm:$0xff]
  %v1126 = vld [vmem:[%s3 + $0x78] sm:$0xff]
  %v1127 = vld [vmem:[%s3 + $0x80] sm:$0xff]
  %v1128 = vld [vmem:[%s3 + $0x88] sm:$0xff]
  %v1129 = vld [vmem:[%s3 + $0x90] sm:$0xff]
  %v1130 = vld [vmem:[%s3 + $0x98] sm:$0xff]
  %v1131 = vld [vmem:[%s3 + $0xa0] sm:$0xff]
  %v1132 = vld [vmem:[%s3 + $0xa8] sm:$0xff]
  %v1133 = vld [vmem:[%s3 + $0xb0] sm:$0xff]
  %v1134 = vld [vmem:[%s3 + $0xb8] sm:$0xff]
  %v1135 = vld [vmem:[%s3 + $0xc0] sm:$0xff]
  %v1136 = vld [vmem:[%s3 + $0xc8] sm:$0xff]
  %v1137 = vld [vmem:[%s3 + $0xd0] sm:$0xff]
  %v1138 = vld [vmem:[%s3 + $0xd8] sm:$0xff]
  %v1139 = vld [vmem:[%s3 + $0xe0] sm:$0xff]
  %v1140 = vld [vmem:[%s3 + $0xe8] sm:$0xff]
  %v1141 = vld [vmem:[%s3 + $0xf0] sm:$0xff]
  %v1142 = vld [vmem:[%s3 + $0xf8] sm:$0xff]
  %v1143 = vld [vmem:[%s3 + $0x100] sm:$0xff]
  %v1144 = vld [vmem:[%s3 + $0x108] sm:$0xff]
  %v1145 = vld [vmem:[%s3 + $0x110] sm:$0xff]
  %v1146 = vld [vmem:[%s3 + $0x118] sm:$0xff]
  %v1147 = vld [vmem:[%s3 + $0x120] sm:$0xff]
  %v1148 = vld [vmem:[%s3 + $0x128] sm:$0xff]
  %v1149 = vld [vmem:[%s3 + $0x130] sm:$0xff]
  %v1150 = vld [vmem:[%s3 + $0x138] sm:$0xff]
  %v1151 = vld [vmem:[%s3 + $0x140] sm:$0xff]
  %v1152 = vld [vmem:[%s3 + $0x148] sm:$0xff]
  %v1153 = vld [vmem:[%s3 + $0x150] sm:$0xff]
  %v1154 = vld [vmem:[%s3 + $0x158] sm:$0xff]
  %v1155 = vld [vmem:[%s3 + $0x160] sm:$0xff]
  %v1156 = vld [vmem:[%s3 + $0x168] sm:$0xff]
  %v1157 = vld [vmem:[%s3 + $0x170] sm:$0xff]
  %v1158 = vld [vmem:[%s3 + $0x178] sm:$0xff]
  %v1159 = vld [vmem:[%s3 + $0x180] sm:$0xff]
  %v1160 = vld [vmem:[%s3 + $0x188] sm:$0xff]
  %v1161 = vld [vmem:[%s3 + $0x190] sm:$0xff]
  %v1162 = vld [vmem:[%s3 + $0x198] sm:$0xff]
  %v1163 = vld [vmem:[%s3 + $0x1a0] sm:$0xff]
  %v1164 = vld [vmem:[%s3 + $0x1a8] sm:$0xff]
  %v1165 = vld [vmem:[%s3 + $0x1b0] sm:$0xff]
  %v1166 = vld [vmem:[%s3 + $0x1b8] sm:$0xff]
  %v1167 = vld [vmem:[%s3 + $0x1c0] sm:$0xff]
  %v1168 = vld [vmem:[%s3 + $0x1c8] sm:$0xff]
  %v1169 = vld [vmem:[%s3 + $0x1d0] sm:$0xff]
  %v1170 = vld [vmem:[%s3 + $0x1d8] sm:$0xff]
  %v1171 = vld [vmem:[%s3 + $0x1e0] sm:$0xff]
  %v1172 = vld [vmem:[%s3 + $0x1e8] sm:$0xff]
  %v1173 = vld [vmem:[%s3 + $0x1f0] sm:$0xff]
  %v1174 = vld [vmem:[%s3 + $0x1f8] sm:$0xff]
  %v1175 = vld [vmem:[%s3 + $0x200] sm:$0xff]
  %v1176 = vld [vmem:[%s3 + $0x208] sm:$0xff]
  %v1177 = vld [vmem:[%s3 + $0x210] sm:$0xff]
  %v1178 = vld [vmem:[%s3 + $0x218] sm:$0xff]
  %v1179 = vld [vmem:[%s3 + $0x220] sm:$0xff]
  %v1180 = vld [vmem:[%s3 + $0x228] sm:$0xff]
  %v1181 = vld [vmem:[%s3 + $0x230] sm:$0xff]
  %v1182 = vld [vmem:[%s3 + $0x238] sm:$0xff]
  %v1183 = vadd.f32 %v1039, %v1111
  %v1184 = vadd.f32 %v1040, %v1112
  %v1185 = vadd.f32 %v1041, %v1113
  %v1186 = vadd.f32 %v1042, %v1114
  %v1187 = vadd.f32 %v1043, %v1115
  %v1188 = vadd.f32 %v1044, %v1116
  %v1189 = vadd.f32 %v1045, %v1117
  %v1190 = vadd.f32 %v1046, %v1118
  %v1191 = vadd.f32 %v1047, %v1119
  %v1192 = vadd.f32 %v1048, %v1120
  %v1193 = vadd.f32 %v1049, %v1121
  %v1194 = vadd.f32 %v1050, %v1122
  %v1195 = vadd.f32 %v1051, %v1123
  %v1196 = vadd.f32 %v1052, %v1124
  %v1197 = vadd.f32 %v1053, %v1125
  %v1198 = vadd.f32 %v1054, %v1126
  %v1199 = vadd.f32 %v1055, %v1127
  %v1200 = vadd.f32 %v1056, %v1128
  %v1201 = vadd.f32 %v1057, %v1129
  %v1202 = vadd.f32 %v1058, %v1130
  %v1203 = vadd.f32 %v1059, %v1131
  %v1204 = vadd.f32 %v1060, %v1132
  %v1205 = vadd.f32 %v1061, %v1133
  %v1206 = vadd.f32 %v1062, %v1134
  %v1207 = vadd.f32 %v1063, %v1135
  %v1208 = vadd.f32 %v1064, %v1136
  %v1209 = vadd.f32 %v1065, %v1137
  %v1210 = vadd.f32 %v1066, %v1138
  %v1211 = vadd.f32 %v1067, %v1139
  %v1212 = vadd.f32 %v1068, %v1140
  %v1213 = vadd.f32 %v1069, %v1141
  %v1214 = vadd.f32 %v1070, %v1142
  %v1215 = vadd.f32 %v1071, %v1143
  %v1216 = vadd.f32 %v1072, %v1144
  %v1217 = vadd.f32 %v1073, %v1145
  %v1218 = vadd.f32 %v1074, %v1146
  %v1219 = vadd.f32 %v1075, %v1147
  %v1220 = vadd.f32 %v1076, %v1148
  %v1221 = vadd.f32 %v1077, %v1149
  %v1222 = vadd.f32 %v1078, %v1150
  %v1223 = vadd.f32 %v1079, %v1151
  %v1224 = vadd.f32 %v1080, %v1152
  %v1225 = vadd.f32 %v1081, %v1153
  %v1226 = vadd.f32 %v1082, %v1154
  %v1227 = vadd.f32 %v1083, %v1155
  %v1228 = vadd.f32 %v1084, %v1156
  %v1229 = vadd.f32 %v1085, %v1157
  %v1230 = vadd.f32 %v1086, %v1158
  %v1231 = vadd.f32 %v1087, %v1159
  %v1232 = vadd.f32 %v1088, %v1160
  %v1233 = vadd.f32 %v1089, %v1161
  %v1234 = vadd.f32 %v1090, %v1162
  %v1235 = vadd.f32 %v1091, %v1163
  %v1236 = vadd.f32 %v1092, %v1164
  %v1237 = vadd.f32 %v1093, %v1165
  %v1238 = vadd.f32 %v1094, %v1166
  %v1239 = vadd.f32 %v1095, %v1167
  %v1240 = vadd.f32 %v1096, %v1168
  %v1241 = vadd.f32 %v1097, %v1169
  %v1242 = vadd.f32 %v1098, %v1170
  %v1243 = vadd.f32 %v1099, %v1171
  %v1244 = vadd.f32 %v1100, %v1172
  %v1245 = vadd.f32 %v1101, %v1173
  %v1246 = vadd.f32 %v1102, %v1174
  %v1247 = vadd.f32 %v1103, %v1175
  %v1248 = vadd.f32 %v1104, %v1176
  %v1249 = vadd.f32 %v1105, %v1177
  %v1250 = vadd.f32 %v1106, %v1178
  %v1251 = vadd.f32 %v1107, %v1179
  %v1252 = vadd.f32 %v1108, %v1180
  %v1253 = vadd.f32 %v1109, %v1181
  %v1254 = vadd.f32 %v1110, %v1182
  %v1255 = vmul.f32 %v1183, 0.16666667
  %v1256 = vmul.f32 %v1184, 0.16666667
  %v1257 = vmul.f32 %v1185, 0.16666667
  %v1258 = vmul.f32 %v1186, 0.16666667
  %v1259 = vmul.f32 %v1187, 0.16666667
  %v1260 = vmul.f32 %v1188, 0.16666667
  %v1261 = vmul.f32 %v1189, 0.16666667
  %v1262 = vmul.f32 %v1190, 0.16666667
  %v1263 = vmul.f32 %v1191, 0.16666667
  %v1264 = vmul.f32 %v1192, 0.16666667
  %v1265 = vmul.f32 %v1193, 0.16666667
  %v1266 = vmul.f32 %v1194, 0.16666667
  %v1267 = vmul.f32 %v1195, 0.16666667
  %v1268 = vmul.f32 %v1196, 0.16666667
  %v1269 = vmul.f32 %v1197, 0.16666667
  %v1270 = vmul.f32 %v1198, 0.16666667
  %v1271 = vmul.f32 %v1199, 0.16666667
  %v1272 = vmul.f32 %v1200, 0.16666667
  %v1273 = vmul.f32 %v1201, 0.16666667
  %v1274 = vmul.f32 %v1202, 0.16666667
  %v1275 = vmul.f32 %v1203, 0.16666667
  %v1276 = vmul.f32 %v1204, 0.16666667
  %v1277 = vmul.f32 %v1205, 0.16666667
  %v1278 = vmul.f32 %v1206, 0.16666667
  %v1279 = vmul.f32 %v1207, 0.16666667
  %v1280 = vmul.f32 %v1208, 0.16666667
  %v1281 = vmul.f32 %v1209, 0.16666667
  %v1282 = vmul.f32 %v1210, 0.16666667
  %v1283 = vmul.f32 %v1211, 0.16666667
  %v1284 = vmul.f32 %v1212, 0.16666667
  %v1285 = vmul.f32 %v1213, 0.16666667
  %v1286 = vmul.f32 %v1214, 0.16666667
  %v1287 = vmul.f32 %v1215, 0.16666667
  %v1288 = vmul.f32 %v1216, 0.16666667
  %v1289 = vmul.f32 %v1217, 0.16666667
  %v1290 = vmul.f32 %v1218, 0.16666667
  %v1291 = vmul.f32 %v1219, 0.16666667
  %v1292 = vmul.f32 %v1220, 0.16666667
  %v1293 = vmul.f32 %v1221, 0.16666667
  %v1294 = vmul.f32 %v1222, 0.16666667
  %v1295 = vmul.f32 %v1223, 0.16666667
  %v1296 = vmul.f32 %v1224, 0.16666667
  %v1297 = vmul.f32 %v1225, 0.16666667
  %v1298 = vmul.f32 %v1226, 0.16666667
  %v1299 = vmul.f32 %v1227, 0.16666667
  %v1300 = vmul.f32 %v1228, 0.16666667
  %v1301 = vmul.f32 %v1229, 0.16666667
  %v1302 = vmul.f32 %v1230, 0.16666667
  %v1303 = vmul.f32 %v1231, 0.16666667
  %v1304 = vmul.f32 %v1232, 0.16666667
  %v1305 = vmul.f32 %v1233, 0.16666667
  %v1306 = vmul.f32 %v1234, 0.16666667
  %v1307 = vmul.f32 %v1235, 0.16666667
  %v1308 = vmul.f32 %v1236, 0.16666667
  %v1309 = vmul.f32 %v1237, 0.16666667
  %v1310 = vmul.f32 %v1238, 0.16666667
  %v1311 = vmul.f32 %v1239, 0.16666667
  %v1312 = vmul.f32 %v1240, 0.16666667
  %v1313 = vmul.f32 %v1241, 0.16666667
  %v1314 = vmul.f32 %v1242, 0.16666667
  %v1315 = vmul.f32 %v1243, 0.16666667
  %v1316 = vmul.f32 %v1244, 0.16666667
  %v1317 = vmul.f32 %v1245, 0.16666667
  %v1318 = vmul.f32 %v1246, 0.16666667
  %v1319 = vmul.f32 %v1247, 0.16666667
  %v1320 = vmul.f32 %v1248, 0.16666667
  %v1321 = vmul.f32 %v1249, 0.16666667
  %v1322 = vmul.f32 %v1250, 0.16666667
  %v1323 = vmul.f32 %v1251, 0.16666667
  %v1324 = vmul.f32 %v1252, 0.16666667
  %v1325 = vmul.f32 %v1253, 0.16666667
  %v1326 = vmul.f32 %v1254, 0.16666667
  %v1327 = vadd.f32 %v1255, 0.5
  %v1328 = vadd.f32 %v1256, 0.5
  %v1329 = vadd.f32 %v1257, 0.5
  %v1330 = vadd.f32 %v1258, 0.5
  %v1331 = vadd.f32 %v1259, 0.5
  %v1332 = vadd.f32 %v1260, 0.5
  %v1333 = vadd.f32 %v1261, 0.5
  %v1334 = vadd.f32 %v1262, 0.5
  %v1335 = vadd.f32 %v1263, 0.5
  %v1336 = vadd.f32 %v1264, 0.5
  %v1337 = vadd.f32 %v1265, 0.5
  %v1338 = vadd.f32 %v1266, 0.5
  %v1339 = vadd.f32 %v1267, 0.5
  %v1340 = vadd.f32 %v1268, 0.5
  %v1341 = vadd.f32 %v1269, 0.5
  %v1342 = vadd.f32 %v1270, 0.5
  %v1343 = vadd.f32 %v1271, 0.5
  %v1344 = vadd.f32 %v1272, 0.5
  %v1345 = vadd.f32 %v1273, 0.5
  %v1346 = vadd.f32 %v1274, 0.5
  %v1347 = vadd.f32 %v1275, 0.5
  %v1348 = vadd.f32 %v1276, 0.5
  %v1349 = vadd.f32 %v1277, 0.5
  %v1350 = vadd.f32 %v1278, 0.5
  %v1351 = vadd.f32 %v1279, 0.5
  %v1352 = vadd.f32 %v1280, 0.5
  %v1353 = vadd.f32 %v1281, 0.5
  %v1354 = vadd.f32 %v1282, 0.5
  %v1355 = vadd.f32 %v1283, 0.5
  %v1356 = vadd.f32 %v1284, 0.5
  %v1357 = vadd.f32 %v1285, 0.5
  %v1358 = vadd.f32 %v1286, 0.5
  %v1359 = vadd.f32 %v1287, 0.5
  %v1360 = vadd.f32 %v1288, 0.5
  %v1361 = vadd.f32 %v1289, 0.5
  %v1362 = vadd.f32 %v1290, 0.5
  %v1363 = vadd.f32 %v1291, 0.5
  %v1364 = vadd.f32 %v1292, 0.5
  %v1365 = vadd.f32 %v1293, 0.5
  %v1366 = vadd.f32 %v1294, 0.5
  %v1367 = vadd.f32 %v1295, 0.5
  %v1368 = vadd.f32 %v1296, 0.5
  %v1369 = vadd.f32 %v1297, 0.5
  %v1370 = vadd.f32 %v1298, 0.5
  %v1371 = vadd.f32 %v1299, 0.5
  %v1372 = vadd.f32 %v1300, 0.5
  %v1373 = vadd.f32 %v1301, 0.5
  %v1374 = vadd.f32 %v1302, 0.5
  %v1375 = vadd.f32 %v1303, 0.5
  %v1376 = vadd.f32 %v1304, 0.5
  %v1377 = vadd.f32 %v1305, 0.5
  %v1378 = vadd.f32 %v1306, 0.5
  %v1379 = vadd.f32 %v1307, 0.5
  %v1380 = vadd.f32 %v1308, 0.5
  %v1381 = vadd.f32 %v1309, 0.5
  %v1382 = vadd.f32 %v1310, 0.5
  %v1383 = vadd.f32 %v1311, 0.5
  %v1384 = vadd.f32 %v1312, 0.5
  %v1385 = vadd.f32 %v1313, 0.5
  %v1386 = vadd.f32 %v1314, 0.5
  %v1387 = vadd.f32 %v1315, 0.5
  %v1388 = vadd.f32 %v1316, 0.5
  %v1389 = vadd.f32 %v1317, 0.5
  %v1390 = vadd.f32 %v1318, 0.5
  %v1391 = vadd.f32 %v1319, 0.5
  %v1392 = vadd.f32 %v1320, 0.5
  %v1393 = vadd.f32 %v1321, 0.5
  %v1394 = vadd.f32 %v1322, 0.5
  %v1395 = vadd.f32 %v1323, 0.5
  %v1396 = vadd.f32 %v1324, 0.5
  %v1397 = vadd.f32 %v1325, 0.5
  %v1398 = vadd.f32 %v1326, 0.5
  %v1399 = vmax.f32 %v1327, 0.0
  %v1400 = vmax.f32 %v1328, 0.0
  %v1401 = vmax.f32 %v1329, 0.0
  %v1402 = vmax.f32 %v1330, 0.0
  %v1403 = vmax.f32 %v1331, 0.0
  %v1404 = vmax.f32 %v1332, 0.0
  %v1405 = vmax.f32 %v1333, 0.0
  %v1406 = vmax.f32 %v1334, 0.0
  %v1407 = vmax.f32 %v1335, 0.0
  %v1408 = vmax.f32 %v1336, 0.0
  %v1409 = vmax.f32 %v1337, 0.0
  %v1410 = vmax.f32 %v1338, 0.0
  %v1411 = vmax.f32 %v1339, 0.0
  %v1412 = vmax.f32 %v1340, 0.0
  %v1413 = vmax.f32 %v1341, 0.0
  %v1414 = vmax.f32 %v1342, 0.0
  %v1415 = vmax.f32 %v1343, 0.0
  %v1416 = vmax.f32 %v1344, 0.0
  %v1417 = vmax.f32 %v1345, 0.0
  %v1418 = vmax.f32 %v1346, 0.0
  %v1419 = vmax.f32 %v1347, 0.0
  %v1420 = vmax.f32 %v1348, 0.0
  %v1421 = vmax.f32 %v1349, 0.0
  %v1422 = vmax.f32 %v1350, 0.0
  %v1423 = vmax.f32 %v1351, 0.0
  %v1424 = vmax.f32 %v1352, 0.0
  %v1425 = vmax.f32 %v1353, 0.0
  %v1426 = vmax.f32 %v1354, 0.0
  %v1427 = vmax.f32 %v1355, 0.0
  %v1428 = vmax.f32 %v1356, 0.0
  %v1429 = vmax.f32 %v1357, 0.0
  %v1430 = vmax.f32 %v1358, 0.0
  %v1431 = vmax.f32 %v1359, 0.0
  %v1432 = vmax.f32 %v1360, 0.0
  %v1433 = vmax.f32 %v1361, 0.0
  %v1434 = vmax.f32 %v1362, 0.0
  %v1435 = vmax.f32 %v1363, 0.0
  %v1436 = vmax.f32 %v1364, 0.0
  %v1437 = vmax.f32 %v1365, 0.0
  %v1438 = vmax.f32 %v1366, 0.0
  %v1439 = vmax.f32 %v1367, 0.0
  %v1440 = vmax.f32 %v1368, 0.0
  %v1441 = vmax.f32 %v1369, 0.0
  %v1442 = vmax.f32 %v1370, 0.0
  %v1443 = vmax.f32 %v1371, 0.0
  %v1444 = vmax.f32 %v1372, 0.0
  %v1445 = vmax.f32 %v1373, 0.0
  %v1446 = vmax.f32 %v1374, 0.0
  %v1447 = vmax.f32 %v1375, 0.0
  %v1448 = vmax.f32 %v1376, 0.0
  %v1449 = vmax.f32 %v1377, 0.0
  %v1450 = vmax.f32 %v1378, 0.0
  %v1451 = vmax.f32 %v1379, 0.0
  %v1452 = vmax.f32 %v1380, 0.0
  %v1453 = vmax.f32 %v1381, 0.0
  %v1454 = vmax.f32 %v1382, 0.0
  %v1455 = vmax.f32 %v1383, 0.0
  %v1456 = vmax.f32 %v1384, 0.0
  %v1457 = vmax.f32 %v1385, 0.0
  %v1458 = vmax.f32 %v1386, 0.0
  %v1459 = vmax.f32 %v1387, 0.0
  %v1460 = vmax.f32 %v1388, 0.0
  %v1461 = vmax.f32 %v1389, 0.0
  %v1462 = vmax.f32 %v1390, 0.0
  %v1463 = vmax.f32 %v1391, 0.0
  %v1464 = vmax.f32 %v1392, 0.0
  %v1465 = vmax.f32 %v1393, 0.0
  %v1466 = vmax.f32 %v1394, 0.0
  %v1467 = vmax.f32 %v1395, 0.0
  %v1468 = vmax.f32 %v1396, 0.0
  %v1469 = vmax.f32 %v1397, 0.0
  %v1470 = vmax.f32 %v1398, 0.0
  %v1471 = vmin.f32 %v1399, 1.0
  %v1472 = vmin.f32 %v1400, 1.0
  %v1473 = vmin.f32 %v1401, 1.0
  %v1474 = vmin.f32 %v1402, 1.0
  %v1475 = vmin.f32 %v1403, 1.0
  %v1476 = vmin.f32 %v1404, 1.0
  %v1477 = vmin.f32 %v1405, 1.0
  %v1478 = vmin.f32 %v1406, 1.0
  %v1479 = vmin.f32 %v1407, 1.0
  %v1480 = vmin.f32 %v1408, 1.0
  %v1481 = vmin.f32 %v1409, 1.0
  %v1482 = vmin.f32 %v1410, 1.0
  %v1483 = vmin.f32 %v1411, 1.0
  %v1484 = vmin.f32 %v1412, 1.0
  %v1485 = vmin.f32 %v1413, 1.0
  %v1486 = vmin.f32 %v1414, 1.0
  %v1487 = vmin.f32 %v1415, 1.0
  %v1488 = vmin.f32 %v1416, 1.0
  %v1489 = vmin.f32 %v1417, 1.0
  %v1490 = vmin.f32 %v1418, 1.0
  %v1491 = vmin.f32 %v1419, 1.0
  %v1492 = vmin.f32 %v1420, 1.0
  %v1493 = vmin.f32 %v1421, 1.0
  %v1494 = vmin.f32 %v1422, 1.0
  %v1495 = vmin.f32 %v1423, 1.0
  %v1496 = vmin.f32 %v1424, 1.0
  %v1497 = vmin.f32 %v1425, 1.0
  %v1498 = vmin.f32 %v1426, 1.0
  %v1499 = vmin.f32 %v1427, 1.0
  %v1500 = vmin.f32 %v1428, 1.0
  %v1501 = vmin.f32 %v1429, 1.0
  %v1502 = vmin.f32 %v1430, 1.0
  %v1503 = vmin.f32 %v1431, 1.0
  %v1504 = vmin.f32 %v1432, 1.0
  %v1505 = vmin.f32 %v1433, 1.0
  %v1506 = vmin.f32 %v1434, 1.0
  %v1507 = vmin.f32 %v1435, 1.0
  %v1508 = vmin.f32 %v1436, 1.0
  %v1509 = vmin.f32 %v1437, 1.0
  %v1510 = vmin.f32 %v1438, 1.0
  %v1511 = vmin.f32 %v1439, 1.0
  %v1512 = vmin.f32 %v1440, 1.0
  %v1513 = vmin.f32 %v1441, 1.0
  %v1514 = vmin.f32 %v1442, 1.0
  %v1515 = vmin.f32 %v1443, 1.0
  %v1516 = vmin.f32 %v1444, 1.0
  %v1517 = vmin.f32 %v1445, 1.0
  %v1518 = vmin.f32 %v1446, 1.0
  %v1519 = vmin.f32 %v1447, 1.0
  %v1520 = vmin.f32 %v1448, 1.0
  %v1521 = vmin.f32 %v1449, 1.0
  %v1522 = vmin.f32 %v1450, 1.0
  %v1523 = vmin.f32 %v1451, 1.0
  %v1524 = vmin.f32 %v1452, 1.0
  %v1525 = vmin.f32 %v1453, 1.0
  %v1526 = vmin.f32 %v1454, 1.0
  %v1527 = vmin.f32 %v1455, 1.0
  %v1528 = vmin.f32 %v1456, 1.0
  %v1529 = vmin.f32 %v1457, 1.0
  %v1530 = vmin.f32 %v1458, 1.0
  %v1531 = vmin.f32 %v1459, 1.0
  %v1532 = vmin.f32 %v1460, 1.0
  %v1533 = vmin.f32 %v1461, 1.0
  %v1534 = vmin.f32 %v1462, 1.0
  %v1535 = vmin.f32 %v1463, 1.0
  %v1536 = vmin.f32 %v1464, 1.0
  %v1537 = vmin.f32 %v1465, 1.0
  %v1538 = vmin.f32 %v1466, 1.0
  %v1539 = vmin.f32 %v1467, 1.0
  %v1540 = vmin.f32 %v1468, 1.0
  %v1541 = vmin.f32 %v1469, 1.0
  %v1542 = vmin.f32 %v1470, 1.0
  %v1543 = vld [vmem:[%s4] sm:$0xf]
  %v1544 = vld [vmem:[%s4 + $0x4] sm:$0xf]
  %v1545 = vld [vmem:[%s4 + $0x8] sm:$0xf]
  %v1546 = vld [vmem:[%s4 + $0xc] sm:$0xf]
  %v1547 = vld [vmem:[%s4 + $0x10] sm:$0xf]
  %v1548 = vld [vmem:[%s4 + $0x14] sm:$0xf]
  %v1549 = vld [vmem:[%s4 + $0x18] sm:$0xf]
  %v1550 = vld [vmem:[%s4 + $0x1c] sm:$0xf]
  %v1551 = vld [vmem:[%s4 + $0x20] sm:$0xf]
  %v1552 = vld [vmem:[%s4 + $0x24] sm:$0xf]
  %v1553 = vld [vmem:[%s4 + $0x28] sm:$0xf]
  %v1554 = vld [vmem:[%s4 + $0x2c] sm:$0xf]
  %v1555 = vld [vmem:[%s4 + $0x30] sm:$0xf]
  %v1556 = vld [vmem:[%s4 + $0x34] sm:$0xf]
  %v1557 = vld [vmem:[%s4 + $0x38] sm:$0xf]
  %v1558 = vld [vmem:[%s4 + $0x3c] sm:$0xf]
  %v1559 = vld [vmem:[%s4 + $0x40] sm:$0xf]
  %v1560 = vld [vmem:[%s4 + $0x44] sm:$0xf]
  %v1561 = vld [vmem:[%s4 + $0x48] sm:$0xf]
  %v1562 = vld [vmem:[%s4 + $0x4c] sm:$0xf]
  %v1563 = vld [vmem:[%s4 + $0x50] sm:$0xf]
  %v1564 = vld [vmem:[%s4 + $0x54] sm:$0xf]
  %v1565 = vld [vmem:[%s4 + $0x58] sm:$0xf]
  %v1566 = vld [vmem:[%s4 + $0x5c] sm:$0xf]
  %v1567 = vld [vmem:[%s4 + $0x60] sm:$0xf]
  %v1568 = vld [vmem:[%s4 + $0x64] sm:$0xf]
  %v1569 = vld [vmem:[%s4 + $0x68] sm:$0xf]
  %v1570 = vld [vmem:[%s4 + $0x6c] sm:$0xf]
  %v1571 = vld [vmem:[%s4 + $0x70] sm:$0xf]
  %v1572 = vld [vmem:[%s4 + $0x74] sm:$0xf]
  %v1573 = vld [vmem:[%s4 + $0x78] sm:$0xf]
  %v1574 = vld [vmem:[%s4 + $0x7c] sm:$0xf]
  %v1575 = vld [vmem:[%s4 + $0x80] sm:$0xf]
  %v1576 = vld [vmem:[%s4 + $0x84] sm:$0xf]
  %v1577 = vld [vmem:[%s4 + $0x88] sm:$0xf]
  %v1578 = vld [vmem:[%s4 + $0x8c] sm:$0xf]
  %v1579 = vld [vmem:[%s4 + $0x90] sm:$0xf]
  %v1580 = vld [vmem:[%s4 + $0x94] sm:$0xf]
  %v1581 = vld [vmem:[%s4 + $0x98] sm:$0xf]
  %v1582 = vld [vmem:[%s4 + $0x9c] sm:$0xf]
  %v1583 = vld [vmem:[%s4 + $0xa0] sm:$0xf]
  %v1584 = vld [vmem:[%s4 + $0xa4] sm:$0xf]
  %v1585 = vld [vmem:[%s4 + $0xa8] sm:$0xf]
  %v1586 = vld [vmem:[%s4 + $0xac] sm:$0xf]
  %v1587 = vld [vmem:[%s4 + $0xb0] sm:$0xf]
  %v1588 = vld [vmem:[%s4 + $0xb4] sm:$0xf]
  %v1589 = vld [vmem:[%s4 + $0xb8] sm:$0xf]
  %v1590 = vld [vmem:[%s4 + $0xbc] sm:$0xf]
  %v1591 = vld [vmem:[%s4 + $0xc0] sm:$0xf]
  %v1592 = vld [vmem:[%s4 + $0xc4] sm:$0xf]
  %v1593 = vld [vmem:[%s4 + $0xc8] sm:$0xf]
  %v1594 = vld [vmem:[%s4 + $0xcc] sm:$0xf]
  %v1595 = vld [vmem:[%s4 + $0xd0] sm:$0xf]
  %v1596 = vld [vmem:[%s4 + $0xd4] sm:$0xf]
  %v1597 = vld [vmem:[%s4 + $0xd8] sm:$0xf]
  %v1598 = vld [vmem:[%s4 + $0xdc] sm:$0xf]
  %v1599 = vld [vmem:[%s4 + $0xe0] sm:$0xf]
  %v1600 = vld [vmem:[%s4 + $0xe4] sm:$0xf]
  %v1601 = vld [vmem:[%s4 + $0xe8] sm:$0xf]
  %v1602 = vld [vmem:[%s4 + $0xec] sm:$0xf]
  %v1603 = vld [vmem:[%s4 + $0xf0] sm:$0xf]
  %v1604 = vld [vmem:[%s4 + $0xf4] sm:$0xf]
  %v1605 = vld [vmem:[%s4 + $0xf8] sm:$0xf]
  %v1606 = vld [vmem:[%s4 + $0xfc] sm:$0xf]
  %v1607 = vld [vmem:[%s4 + $0x100] sm:$0xf]
  %v1608 = vld [vmem:[%s4 + $0x104] sm:$0xf]
  %v1609 = vld [vmem:[%s4 + $0x108] sm:$0xf]
  %v1610 = vld [vmem:[%s4 + $0x10c] sm:$0xf]
  %v1611 = vld [vmem:[%s4 + $0x110] sm:$0xf]
  %v1612 = vld [vmem:[%s4 + $0x114] sm:$0xf]
  %v1613 = vld [vmem:[%s4 + $0x118] sm:$0xf]
  %v1614 = vld [vmem:[%s4 + $0x11c] sm:$0xf]
  %v1615 = vunpack.c.l.bf16 %v1543
  %v1616 = vunpack.c.l.bf16 %v1544
  %v1617 = vunpack.c.l.bf16 %v1545
  %v1618 = vunpack.c.l.bf16 %v1546
  %v1619 = vunpack.c.l.bf16 %v1547
  %v1620 = vunpack.c.l.bf16 %v1548
  %v1621 = vunpack.c.l.bf16 %v1549
  %v1622 = vunpack.c.l.bf16 %v1550
  %v1623 = vunpack.c.l.bf16 %v1551
  %v1624 = vunpack.c.l.bf16 %v1552
  %v1625 = vunpack.c.l.bf16 %v1553
  %v1626 = vunpack.c.l.bf16 %v1554
  %v1627 = vunpack.c.l.bf16 %v1555
  %v1628 = vunpack.c.l.bf16 %v1556
  %v1629 = vunpack.c.l.bf16 %v1557
  %v1630 = vunpack.c.l.bf16 %v1558
  %v1631 = vunpack.c.l.bf16 %v1559
  %v1632 = vunpack.c.l.bf16 %v1560
  %v1633 = vunpack.c.l.bf16 %v1561
  %v1634 = vunpack.c.l.bf16 %v1562
  %v1635 = vunpack.c.l.bf16 %v1563
  %v1636 = vunpack.c.l.bf16 %v1564
  %v1637 = vunpack.c.l.bf16 %v1565
  %v1638 = vunpack.c.l.bf16 %v1566
  %v1639 = vunpack.c.l.bf16 %v1567
  %v1640 = vunpack.c.l.bf16 %v1568
  %v1641 = vunpack.c.l.bf16 %v1569
  %v1642 = vunpack.c.l.bf16 %v1570
  %v1643 = vunpack.c.l.bf16 %v1571
  %v1644 = vunpack.c.l.bf16 %v1572
  %v1645 = vunpack.c.l.bf16 %v1573
  %v1646 = vunpack.c.l.bf16 %v1574
  %v1647 = vunpack.c.l.bf16 %v1575
  %v1648 = vunpack.c.l.bf16 %v1576
  %v1649 = vunpack.c.l.bf16 %v1577
  %v1650 = vunpack.c.l.bf16 %v1578
  %v1651 = vunpack.c.l.bf16 %v1579
  %v1652 = vunpack.c.l.bf16 %v1580
  %v1653 = vunpack.c.l.bf16 %v1581
  %v1654 = vunpack.c.l.bf16 %v1582
  %v1655 = vunpack.c.l.bf16 %v1583
  %v1656 = vunpack.c.l.bf16 %v1584
  %v1657 = vunpack.c.l.bf16 %v1585
  %v1658 = vunpack.c.l.bf16 %v1586
  %v1659 = vunpack.c.l.bf16 %v1587
  %v1660 = vunpack.c.l.bf16 %v1588
  %v1661 = vunpack.c.l.bf16 %v1589
  %v1662 = vunpack.c.l.bf16 %v1590
  %v1663 = vunpack.c.l.bf16 %v1591
  %v1664 = vunpack.c.l.bf16 %v1592
  %v1665 = vunpack.c.l.bf16 %v1593
  %v1666 = vunpack.c.l.bf16 %v1594
  %v1667 = vunpack.c.l.bf16 %v1595
  %v1668 = vunpack.c.l.bf16 %v1596
  %v1669 = vunpack.c.l.bf16 %v1597
  %v1670 = vunpack.c.l.bf16 %v1598
  %v1671 = vunpack.c.l.bf16 %v1599
  %v1672 = vunpack.c.l.bf16 %v1600
  %v1673 = vunpack.c.l.bf16 %v1601
  %v1674 = vunpack.c.l.bf16 %v1602
  %v1675 = vunpack.c.l.bf16 %v1603
  %v1676 = vunpack.c.l.bf16 %v1604
  %v1677 = vunpack.c.l.bf16 %v1605
  %v1678 = vunpack.c.l.bf16 %v1606
  %v1679 = vunpack.c.l.bf16 %v1607
  %v1680 = vunpack.c.l.bf16 %v1608
  %v1681 = vunpack.c.l.bf16 %v1609
  %v1682 = vunpack.c.l.bf16 %v1610
  %v1683 = vunpack.c.l.bf16 %v1611
  %v1684 = vunpack.c.l.bf16 %v1612
  %v1685 = vunpack.c.l.bf16 %v1613
  %v1686 = vunpack.c.l.bf16 %v1614
  %1688 = vset.pattern.permute.xlu0 0
  %1689 = vperm.xlu0 %1688, %v1471
  %v1690 = vpop.permute.xlu0 %1689
  %1693 = vset.pattern.permute.xlu0 0
  %1694 = vperm.xlu0 %1693, %v1472
  %v1695 = vpop.permute.xlu0 %1694
  %1698 = vset.pattern.permute.xlu0 0
  %1699 = vperm.xlu0 %1698, %v1473
  %v1700 = vpop.permute.xlu0 %1699
  %1703 = vset.pattern.permute.xlu0 0
  %1704 = vperm.xlu0 %1703, %v1474
  %v1705 = vpop.permute.xlu0 %1704
  %1708 = vset.pattern.permute.xlu0 0
  %1709 = vperm.xlu0 %1708, %v1475
  %v1710 = vpop.permute.xlu0 %1709
  %1713 = vset.pattern.permute.xlu0 0
  %1714 = vperm.xlu0 %1713, %v1476
  %v1715 = vpop.permute.xlu0 %1714
  %1718 = vset.pattern.permute.xlu0 0
  %1719 = vperm.xlu0 %1718, %v1477
  %v1720 = vpop.permute.xlu0 %1719
  %1723 = vset.pattern.permute.xlu0 0
  %1724 = vperm.xlu0 %1723, %v1478
  %v1725 = vpop.permute.xlu0 %1724
  %1728 = vset.pattern.permute.xlu0 0
  %1729 = vperm.xlu0 %1728, %v1479
  %v1730 = vpop.permute.xlu0 %1729
  %1733 = vset.pattern.permute.xlu0 0
  %1734 = vperm.xlu0 %1733, %v1480
  %v1735 = vpop.permute.xlu0 %1734
  %1738 = vset.pattern.permute.xlu0 0
  %1739 = vperm.xlu0 %1738, %v1481
  %v1740 = vpop.permute.xlu0 %1739
  %1743 = vset.pattern.permute.xlu0 0
  %1744 = vperm.xlu0 %1743, %v1482
  %v1745 = vpop.permute.xlu0 %1744
  %1748 = vset.pattern.permute.xlu0 0
  %1749 = vperm.xlu0 %1748, %v1483
  %v1750 = vpop.permute.xlu0 %1749
  %1753 = vset.pattern.permute.xlu0 0
  %1754 = vperm.xlu0 %1753, %v1484
  %v1755 = vpop.permute.xlu0 %1754
  %1758 = vset.pattern.permute.xlu0 0
  %1759 = vperm.xlu0 %1758, %v1485
  %v1760 = vpop.permute.xlu0 %1759
  %1763 = vset.pattern.permute.xlu0 0
  %1764 = vperm.xlu0 %1763, %v1486
  %v1765 = vpop.permute.xlu0 %1764
  %1768 = vset.pattern.permute.xlu0 0
  %1769 = vperm.xlu0 %1768, %v1487
  %v1770 = vpop.permute.xlu0 %1769
  %1773 = vset.pattern.permute.xlu0 0
  %1774 = vperm.xlu0 %1773, %v1488
  %v1775 = vpop.permute.xlu0 %1774
  %1778 = vset.pattern.permute.xlu0 0
  %1779 = vperm.xlu0 %1778, %v1489
  %v1780 = vpop.permute.xlu0 %1779
  %1783 = vset.pattern.permute.xlu0 0
  %1784 = vperm.xlu0 %1783, %v1490
  %v1785 = vpop.permute.xlu0 %1784
  %1788 = vset.pattern.permute.xlu0 0
  %1789 = vperm.xlu0 %1788, %v1491
  %v1790 = vpop.permute.xlu0 %1789
  %1793 = vset.pattern.permute.xlu0 0
  %1794 = vperm.xlu0 %1793, %v1492
  %v1795 = vpop.permute.xlu0 %1794
  %1798 = vset.pattern.permute.xlu0 0
  %1799 = vperm.xlu0 %1798, %v1493
  %v1800 = vpop.permute.xlu0 %1799
  %1803 = vset.pattern.permute.xlu0 0
  %1804 = vperm.xlu0 %1803, %v1494
  %v1805 = vpop.permute.xlu0 %1804
  %1808 = vset.pattern.permute.xlu0 0
  %1809 = vperm.xlu0 %1808, %v1495
  %v1810 = vpop.permute.xlu0 %1809
  %1813 = vset.pattern.permute.xlu0 0
  %1814 = vperm.xlu0 %1813, %v1496
  %v1815 = vpop.permute.xlu0 %1814
  %1818 = vset.pattern.permute.xlu0 0
  %1819 = vperm.xlu0 %1818, %v1497
  %v1820 = vpop.permute.xlu0 %1819
  %1823 = vset.pattern.permute.xlu0 0
  %1824 = vperm.xlu0 %1823, %v1498
  %v1825 = vpop.permute.xlu0 %1824
  %1828 = vset.pattern.permute.xlu0 0
  %1829 = vperm.xlu0 %1828, %v1499
  %v1830 = vpop.permute.xlu0 %1829
  %1833 = vset.pattern.permute.xlu0 0
  %1834 = vperm.xlu0 %1833, %v1500
  %v1835 = vpop.permute.xlu0 %1834
  %1838 = vset.pattern.permute.xlu0 0
  %1839 = vperm.xlu0 %1838, %v1501
  %v1840 = vpop.permute.xlu0 %1839
  %1843 = vset.pattern.permute.xlu0 0
  %1844 = vperm.xlu0 %1843, %v1502
  %v1845 = vpop.permute.xlu0 %1844
  %1848 = vset.pattern.permute.xlu0 0
  %1849 = vperm.xlu0 %1848, %v1503
  %v1850 = vpop.permute.xlu0 %1849
  %1853 = vset.pattern.permute.xlu0 0
  %1854 = vperm.xlu0 %1853, %v1504
  %v1855 = vpop.permute.xlu0 %1854
  %1858 = vset.pattern.permute.xlu0 0
  %1859 = vperm.xlu0 %1858, %v1505
  %v1860 = vpop.permute.xlu0 %1859
  %1863 = vset.pattern.permute.xlu0 0
  %1864 = vperm.xlu0 %1863, %v1506
  %v1865 = vpop.permute.xlu0 %1864
  %1868 = vset.pattern.permute.xlu0 0
  %1869 = vperm.xlu0 %1868, %v1507
  %v1870 = vpop.permute.xlu0 %1869
  %1873 = vset.pattern.permute.xlu0 0
  %1874 = vperm.xlu0 %1873, %v1508
  %v1875 = vpop.permute.xlu0 %1874
  %1878 = vset.pattern.permute.xlu0 0
  %1879 = vperm.xlu0 %1878, %v1509
  %v1880 = vpop.permute.xlu0 %1879
  %1883 = vset.pattern.permute.xlu0 0
  %1884 = vperm.xlu0 %1883, %v1510
  %v1885 = vpop.permute.xlu0 %1884
  %1888 = vset.pattern.permute.xlu0 0
  %1889 = vperm.xlu0 %1888, %v1511
  %v1890 = vpop.permute.xlu0 %1889
  %1893 = vset.pattern.permute.xlu0 0
  %1894 = vperm.xlu0 %1893, %v1512
  %v1895 = vpop.permute.xlu0 %1894
  %1898 = vset.pattern.permute.xlu0 0
  %1899 = vperm.xlu0 %1898, %v1513
  %v1900 = vpop.permute.xlu0 %1899
  %1903 = vset.pattern.permute.xlu0 0
  %1904 = vperm.xlu0 %1903, %v1514
  %v1905 = vpop.permute.xlu0 %1904
  %1908 = vset.pattern.permute.xlu0 0
  %1909 = vperm.xlu0 %1908, %v1515
  %v1910 = vpop.permute.xlu0 %1909
  %1913 = vset.pattern.permute.xlu0 0
  %1914 = vperm.xlu0 %1913, %v1516
  %v1915 = vpop.permute.xlu0 %1914
  %1918 = vset.pattern.permute.xlu0 0
  %1919 = vperm.xlu0 %1918, %v1517
  %v1920 = vpop.permute.xlu0 %1919
  %1923 = vset.pattern.permute.xlu0 0
  %1924 = vperm.xlu0 %1923, %v1518
  %v1925 = vpop.permute.xlu0 %1924
  %1928 = vset.pattern.permute.xlu0 0
  %1929 = vperm.xlu0 %1928, %v1519
  %v1930 = vpop.permute.xlu0 %1929
  %1933 = vset.pattern.permute.xlu0 0
  %1934 = vperm.xlu0 %1933, %v1520
  %v1935 = vpop.permute.xlu0 %1934
  %1938 = vset.pattern.permute.xlu0 0
  %1939 = vperm.xlu0 %1938, %v1521
  %v1940 = vpop.permute.xlu0 %1939
  %1943 = vset.pattern.permute.xlu0 0
  %1944 = vperm.xlu0 %1943, %v1522
  %v1945 = vpop.permute.xlu0 %1944
  %1948 = vset.pattern.permute.xlu0 0
  %1949 = vperm.xlu0 %1948, %v1523
  %v1950 = vpop.permute.xlu0 %1949
  %1953 = vset.pattern.permute.xlu0 0
  %1954 = vperm.xlu0 %1953, %v1524
  %v1955 = vpop.permute.xlu0 %1954
  %1958 = vset.pattern.permute.xlu0 0
  %1959 = vperm.xlu0 %1958, %v1525
  %v1960 = vpop.permute.xlu0 %1959
  %1963 = vset.pattern.permute.xlu0 0
  %1964 = vperm.xlu0 %1963, %v1526
  %v1965 = vpop.permute.xlu0 %1964
  %1968 = vset.pattern.permute.xlu0 0
  %1969 = vperm.xlu0 %1968, %v1527
  %v1970 = vpop.permute.xlu0 %1969
  %1973 = vset.pattern.permute.xlu0 0
  %1974 = vperm.xlu0 %1973, %v1528
  %v1975 = vpop.permute.xlu0 %1974
  %1978 = vset.pattern.permute.xlu0 0
  %1979 = vperm.xlu0 %1978, %v1529
  %v1980 = vpop.permute.xlu0 %1979
  %1983 = vset.pattern.permute.xlu0 0
  %1984 = vperm.xlu0 %1983, %v1530
  %v1985 = vpop.permute.xlu0 %1984
  %1988 = vset.pattern.permute.xlu0 0
  %1989 = vperm.xlu0 %1988, %v1531
  %v1990 = vpop.permute.xlu0 %1989
  %1993 = vset.pattern.permute.xlu0 0
  %1994 = vperm.xlu0 %1993, %v1532
  %v1995 = vpop.permute.xlu0 %1994
  %1998 = vset.pattern.permute.xlu0 0
  %1999 = vperm.xlu0 %1998, %v1533
  %v2000 = vpop.permute.xlu0 %1999
  %2003 = vset.pattern.permute.xlu0 0
  %2004 = vperm.xlu0 %2003, %v1534
  %v2005 = vpop.permute.xlu0 %2004
  %2008 = vset.pattern.permute.xlu0 0
  %2009 = vperm.xlu0 %2008, %v1535
  %v2010 = vpop.permute.xlu0 %2009
  %2013 = vset.pattern.permute.xlu0 0
  %2014 = vperm.xlu0 %2013, %v1536
  %v2015 = vpop.permute.xlu0 %2014
  %2018 = vset.pattern.permute.xlu0 0
  %2019 = vperm.xlu0 %2018, %v1537
  %v2020 = vpop.permute.xlu0 %2019
  %2023 = vset.pattern.permute.xlu0 0
  %2024 = vperm.xlu0 %2023, %v1538
  %v2025 = vpop.permute.xlu0 %2024
  %2028 = vset.pattern.permute.xlu0 0
  %2029 = vperm.xlu0 %2028, %v1539
  %v2030 = vpop.permute.xlu0 %2029
  %2033 = vset.pattern.permute.xlu0 0
  %2034 = vperm.xlu0 %2033, %v1540
  %v2035 = vpop.permute.xlu0 %2034
  %2038 = vset.pattern.permute.xlu0 0
  %2039 = vperm.xlu0 %2038, %v1541
  %v2040 = vpop.permute.xlu0 %2039
  %2043 = vset.pattern.permute.xlu0 0
  %2044 = vperm.xlu0 %2043, %v1542
  %v2045 = vpop.permute.xlu0 %2044
  %v2047 = vmul.f32 %v1690, %v1615
  %v2048 = vmul.f32 %v1695, %v1616
  %v2049 = vmul.f32 %v1700, %v1617
  %v2050 = vmul.f32 %v1705, %v1618
  %v2051 = vmul.f32 %v1710, %v1619
  %v2052 = vmul.f32 %v1715, %v1620
  %v2053 = vmul.f32 %v1720, %v1621
  %v2054 = vmul.f32 %v1725, %v1622
  %v2055 = vmul.f32 %v1730, %v1623
  %v2056 = vmul.f32 %v1735, %v1624
  %v2057 = vmul.f32 %v1740, %v1625
  %v2058 = vmul.f32 %v1745, %v1626
  %v2059 = vmul.f32 %v1750, %v1627
  %v2060 = vmul.f32 %v1755, %v1628
  %v2061 = vmul.f32 %v1760, %v1629
  %v2062 = vmul.f32 %v1765, %v1630
  %v2063 = vmul.f32 %v1770, %v1631
  %v2064 = vmul.f32 %v1775, %v1632
  %v2065 = vmul.f32 %v1780, %v1633
  %v2066 = vmul.f32 %v1785, %v1634
  %v2067 = vmul.f32 %v1790, %v1635
  %v2068 = vmul.f32 %v1795, %v1636
  %v2069 = vmul.f32 %v1800, %v1637
  %v2070 = vmul.f32 %v1805, %v1638
  %v2071 = vmul.f32 %v1810, %v1639
  %v2072 = vmul.f32 %v1815, %v1640
  %v2073 = vmul.f32 %v1820, %v1641
  %v2074 = vmul.f32 %v1825, %v1642
  %v2075 = vmul.f32 %v1830, %v1643
  %v2076 = vmul.f32 %v1835, %v1644
  %v2077 = vmul.f32 %v1840, %v1645
  %v2078 = vmul.f32 %v1845, %v1646
  %v2079 = vmul.f32 %v1850, %v1647
  %v2080 = vmul.f32 %v1855, %v1648
  %v2081 = vmul.f32 %v1860, %v1649
  %v2082 = vmul.f32 %v1865, %v1650
  %v2083 = vmul.f32 %v1870, %v1651
  %v2084 = vmul.f32 %v1875, %v1652
  %v2085 = vmul.f32 %v1880, %v1653
  %v2086 = vmul.f32 %v1885, %v1654
  %v2087 = vmul.f32 %v1890, %v1655
  %v2088 = vmul.f32 %v1895, %v1656
  %v2089 = vmul.f32 %v1900, %v1657
  %v2090 = vmul.f32 %v1905, %v1658
  %v2091 = vmul.f32 %v1910, %v1659
  %v2092 = vmul.f32 %v1915, %v1660
  %v2093 = vmul.f32 %v1920, %v1661
  %v2094 = vmul.f32 %v1925, %v1662
  %v2095 = vmul.f32 %v1930, %v1663
  %v2096 = vmul.f32 %v1935, %v1664
  %v2097 = vmul.f32 %v1940, %v1665
  %v2098 = vmul.f32 %v1945, %v1666
  %v2099 = vmul.f32 %v1950, %v1667
  %v2100 = vmul.f32 %v1955, %v1668
  %v2101 = vmul.f32 %v1960, %v1669
  %v2102 = vmul.f32 %v1965, %v1670
  %v2103 = vmul.f32 %v1970, %v1671
  %v2104 = vmul.f32 %v1975, %v1672
  %v2105 = vmul.f32 %v1980, %v1673
  %v2106 = vmul.f32 %v1985, %v1674
  %v2107 = vmul.f32 %v1990, %v1675
  %v2108 = vmul.f32 %v1995, %v1676
  %v2109 = vmul.f32 %v2000, %v1677
  %v2110 = vmul.f32 %v2005, %v1678
  %v2111 = vmul.f32 %v2010, %v1679
  %v2112 = vmul.f32 %v2015, %v1680
  %v2113 = vmul.f32 %v2020, %v1681
  %v2114 = vmul.f32 %v2025, %v1682
  %v2115 = vmul.f32 %v2030, %v1683
  %v2116 = vmul.f32 %v2035, %v1684
  %v2117 = vmul.f32 %v2040, %v1685
  %v2118 = vmul.f32 %v2045, %v1686
  %v2119 = vpack.c.bf16 %v2047, %v2047
  %v2120 = vpack.c.bf16 %v2048, %v2048
  %v2121 = vpack.c.bf16 %v2049, %v2049
  %v2122 = vpack.c.bf16 %v2050, %v2050
  %v2123 = vpack.c.bf16 %v2051, %v2051
  %v2124 = vpack.c.bf16 %v2052, %v2052
  %v2125 = vpack.c.bf16 %v2053, %v2053
  %v2126 = vpack.c.bf16 %v2054, %v2054
  %v2127 = vpack.c.bf16 %v2055, %v2055
  %v2128 = vpack.c.bf16 %v2056, %v2056
  %v2129 = vpack.c.bf16 %v2057, %v2057
  %v2130 = vpack.c.bf16 %v2058, %v2058
  %v2131 = vpack.c.bf16 %v2059, %v2059
  %v2132 = vpack.c.bf16 %v2060, %v2060
  %v2133 = vpack.c.bf16 %v2061, %v2061
  %v2134 = vpack.c.bf16 %v2062, %v2062
  %v2135 = vpack.c.bf16 %v2063, %v2063
  %v2136 = vpack.c.bf16 %v2064, %v2064
  %v2137 = vpack.c.bf16 %v2065, %v2065
  %v2138 = vpack.c.bf16 %v2066, %v2066
  %v2139 = vpack.c.bf16 %v2067, %v2067
  %v2140 = vpack.c.bf16 %v2068, %v2068
  %v2141 = vpack.c.bf16 %v2069, %v2069
  %v2142 = vpack.c.bf16 %v2070, %v2070
  %v2143 = vpack.c.bf16 %v2071, %v2071
  %v2144 = vpack.c.bf16 %v2072, %v2072
  %v2145 = vpack.c.bf16 %v2073, %v2073
  %v2146 = vpack.c.bf16 %v2074, %v2074
  %v2147 = vpack.c.bf16 %v2075, %v2075
  %v2148 = vpack.c.bf16 %v2076, %v2076
  %v2149 = vpack.c.bf16 %v2077, %v2077
  %v2150 = vpack.c.bf16 %v2078, %v2078
  %v2151 = vpack.c.bf16 %v2079, %v2079
  %v2152 = vpack.c.bf16 %v2080, %v2080
  %v2153 = vpack.c.bf16 %v2081, %v2081
  %v2154 = vpack.c.bf16 %v2082, %v2082
  %v2155 = vpack.c.bf16 %v2083, %v2083
  %v2156 = vpack.c.bf16 %v2084, %v2084
  %v2157 = vpack.c.bf16 %v2085, %v2085
  %v2158 = vpack.c.bf16 %v2086, %v2086
  %v2159 = vpack.c.bf16 %v2087, %v2087
  %v2160 = vpack.c.bf16 %v2088, %v2088
  %v2161 = vpack.c.bf16 %v2089, %v2089
  %v2162 = vpack.c.bf16 %v2090, %v2090
  %v2163 = vpack.c.bf16 %v2091, %v2091
  %v2164 = vpack.c.bf16 %v2092, %v2092
  %v2165 = vpack.c.bf16 %v2093, %v2093
  %v2166 = vpack.c.bf16 %v2094, %v2094
  %v2167 = vpack.c.bf16 %v2095, %v2095
  %v2168 = vpack.c.bf16 %v2096, %v2096
  %v2169 = vpack.c.bf16 %v2097, %v2097
  %v2170 = vpack.c.bf16 %v2098, %v2098
  %v2171 = vpack.c.bf16 %v2099, %v2099
  %v2172 = vpack.c.bf16 %v2100, %v2100
  %v2173 = vpack.c.bf16 %v2101, %v2101
  %v2174 = vpack.c.bf16 %v2102, %v2102
  %v2175 = vpack.c.bf16 %v2103, %v2103
  %v2176 = vpack.c.bf16 %v2104, %v2104
  %v2177 = vpack.c.bf16 %v2105, %v2105
  %v2178 = vpack.c.bf16 %v2106, %v2106
  %v2179 = vpack.c.bf16 %v2107, %v2107
  %v2180 = vpack.c.bf16 %v2108, %v2108
  %v2181 = vpack.c.bf16 %v2109, %v2109
  %v2182 = vpack.c.bf16 %v2110, %v2110
  %v2183 = vpack.c.bf16 %v2111, %v2111
  %v2184 = vpack.c.bf16 %v2112, %v2112
  %v2185 = vpack.c.bf16 %v2113, %v2113
  %v2186 = vpack.c.bf16 %v2114, %v2114
  %v2187 = vpack.c.bf16 %v2115, %v2115
  %v2188 = vpack.c.bf16 %v2116, %v2116
  %v2189 = vpack.c.bf16 %v2117, %v2117
  %v2190 = vpack.c.bf16 %v2118, %v2118
  %vm2191 = vcmask 396288
  %2192 = vst.msk [vmem:[%s5] sm:$0xf] %vm2191, %v2119
  %2193 = vst.msk [vmem:[%s5 + $0x4] sm:$0xf] %vm2191, %v2120
  %2194 = vst.msk [vmem:[%s5 + $0x8] sm:$0xf] %vm2191, %v2121
  %2195 = vst.msk [vmem:[%s5 + $0xc] sm:$0xf] %vm2191, %v2122
  %2196 = vst.msk [vmem:[%s5 + $0x10] sm:$0xf] %vm2191, %v2123
  %2197 = vst.msk [vmem:[%s5 + $0x14] sm:$0xf] %vm2191, %v2124
  %2198 = vst.msk [vmem:[%s5 + $0x18] sm:$0xf] %vm2191, %v2125
  %2199 = vst.msk [vmem:[%s5 + $0x1c] sm:$0xf] %vm2191, %v2126
  %2200 = vst.msk [vmem:[%s5 + $0x20] sm:$0xf] %vm2191, %v2127
  %2201 = vst.msk [vmem:[%s5 + $0x24] sm:$0xf] %vm2191, %v2128
  %2202 = vst.msk [vmem:[%s5 + $0x28] sm:$0xf] %vm2191, %v2129
  %2203 = vst.msk [vmem:[%s5 + $0x2c] sm:$0xf] %vm2191, %v2130
  %2204 = vst.msk [vmem:[%s5 + $0x30] sm:$0xf] %vm2191, %v2131
  %2205 = vst.msk [vmem:[%s5 + $0x34] sm:$0xf] %vm2191, %v2132
  %2206 = vst.msk [vmem:[%s5 + $0x38] sm:$0xf] %vm2191, %v2133
  %2207 = vst.msk [vmem:[%s5 + $0x3c] sm:$0xf] %vm2191, %v2134
  %2208 = vst.msk [vmem:[%s5 + $0x40] sm:$0xf] %vm2191, %v2135
  %2209 = vst.msk [vmem:[%s5 + $0x44] sm:$0xf] %vm2191, %v2136
  %2210 = vst.msk [vmem:[%s5 + $0x48] sm:$0xf] %vm2191, %v2137
  %2211 = vst.msk [vmem:[%s5 + $0x4c] sm:$0xf] %vm2191, %v2138
  %2212 = vst.msk [vmem:[%s5 + $0x50] sm:$0xf] %vm2191, %v2139
  %2213 = vst.msk [vmem:[%s5 + $0x54] sm:$0xf] %vm2191, %v2140
  %2214 = vst.msk [vmem:[%s5 + $0x58] sm:$0xf] %vm2191, %v2141
  %2215 = vst.msk [vmem:[%s5 + $0x5c] sm:$0xf] %vm2191, %v2142
  %2216 = vst.msk [vmem:[%s5 + $0x60] sm:$0xf] %vm2191, %v2143
  %2217 = vst.msk [vmem:[%s5 + $0x64] sm:$0xf] %vm2191, %v2144
  %2218 = vst.msk [vmem:[%s5 + $0x68] sm:$0xf] %vm2191, %v2145
  %2219 = vst.msk [vmem:[%s5 + $0x6c] sm:$0xf] %vm2191, %v2146
  %2220 = vst.msk [vmem:[%s5 + $0x70] sm:$0xf] %vm2191, %v2147
  %2221 = vst.msk [vmem:[%s5 + $0x74] sm:$0xf] %vm2191, %v2148
  %2222 = vst.msk [vmem:[%s5 + $0x78] sm:$0xf] %vm2191, %v2149
  %2223 = vst.msk [vmem:[%s5 + $0x7c] sm:$0xf] %vm2191, %v2150
  %2224 = vst.msk [vmem:[%s5 + $0x80] sm:$0xf] %vm2191, %v2151
  %2225 = vst.msk [vmem:[%s5 + $0x84] sm:$0xf] %vm2191, %v2152
  %2226 = vst.msk [vmem:[%s5 + $0x88] sm:$0xf] %vm2191, %v2153
  %2227 = vst.msk [vmem:[%s5 + $0x8c] sm:$0xf] %vm2191, %v2154
  %2228 = vst.msk [vmem:[%s5 + $0x90] sm:$0xf] %vm2191, %v2155
  %2229 = vst.msk [vmem:[%s5 + $0x94] sm:$0xf] %vm2191, %v2156
  %2230 = vst.msk [vmem:[%s5 + $0x98] sm:$0xf] %vm2191, %v2157
  %2231 = vst.msk [vmem:[%s5 + $0x9c] sm:$0xf] %vm2191, %v2158
  %2232 = vst.msk [vmem:[%s5 + $0xa0] sm:$0xf] %vm2191, %v2159
  %2233 = vst.msk [vmem:[%s5 + $0xa4] sm:$0xf] %vm2191, %v2160
  %2234 = vst.msk [vmem:[%s5 + $0xa8] sm:$0xf] %vm2191, %v2161
  %2235 = vst.msk [vmem:[%s5 + $0xac] sm:$0xf] %vm2191, %v2162
  %2236 = vst.msk [vmem:[%s5 + $0xb0] sm:$0xf] %vm2191, %v2163
  %2237 = vst.msk [vmem:[%s5 + $0xb4] sm:$0xf] %vm2191, %v2164
  %2238 = vst.msk [vmem:[%s5 + $0xb8] sm:$0xf] %vm2191, %v2165
  %2239 = vst.msk [vmem:[%s5 + $0xbc] sm:$0xf] %vm2191, %v2166
  %2240 = vst.msk [vmem:[%s5 + $0xc0] sm:$0xf] %vm2191, %v2167
  %2241 = vst.msk [vmem:[%s5 + $0xc4] sm:$0xf] %vm2191, %v2168
  %2242 = vst.msk [vmem:[%s5 + $0xc8] sm:$0xf] %vm2191, %v2169
  %2243 = vst.msk [vmem:[%s5 + $0xcc] sm:$0xf] %vm2191, %v2170
  %2244 = vst.msk [vmem:[%s5 + $0xd0] sm:$0xf] %vm2191, %v2171
  %2245 = vst.msk [vmem:[%s5 + $0xd4] sm:$0xf] %vm2191, %v2172
  %2246 = vst.msk [vmem:[%s5 + $0xd8] sm:$0xf] %vm2191, %v2173
  %2247 = vst.msk [vmem:[%s5 + $0xdc] sm:$0xf] %vm2191, %v2174
  %2248 = vst.msk [vmem:[%s5 + $0xe0] sm:$0xf] %vm2191, %v2175
  %2249 = vst.msk [vmem:[%s5 + $0xe4] sm:$0xf] %vm2191, %v2176
  %2250 = vst.msk [vmem:[%s5 + $0xe8] sm:$0xf] %vm2191, %v2177
  %2251 = vst.msk [vmem:[%s5 + $0xec] sm:$0xf] %vm2191, %v2178
  %2252 = vst.msk [vmem:[%s5 + $0xf0] sm:$0xf] %vm2191, %v2179
  %2253 = vst.msk [vmem:[%s5 + $0xf4] sm:$0xf] %vm2191, %v2180
  %2254 = vst.msk [vmem:[%s5 + $0xf8] sm:$0xf] %vm2191, %v2181
  %2255 = vst.msk [vmem:[%s5 + $0xfc] sm:$0xf] %vm2191, %v2182
  %2256 = vst.msk [vmem:[%s5 + $0x100] sm:$0xf] %vm2191, %v2183
  %2257 = vst.msk [vmem:[%s5 + $0x104] sm:$0xf] %vm2191, %v2184
  %2258 = vst.msk [vmem:[%s5 + $0x108] sm:$0xf] %vm2191, %v2185
  %2259 = vst.msk [vmem:[%s5 + $0x10c] sm:$0xf] %vm2191, %v2186
  %2260 = vst.msk [vmem:[%s5 + $0x110] sm:$0xf] %vm2191, %v2187
  %2261 = vst.msk [vmem:[%s5 + $0x114] sm:$0xf] %vm2191, %v2188
  %2262 = vst.msk [vmem:[%s5 + $0x118] sm:$0xf] %vm2191, %v2189
  %2263 = vst.msk [vmem:[%s5 + $0x11c] sm:$0xf] %vm2191, %v2190
  // Predicated region
  $region22: #{tpu_custom_call.1} parent=0 // pred_check
    _
  $region23: #{tpu_custom_call.1} parent=0 // pred_check_branch
    %2265 = sbr.rel (0) target = $region25
  $region24: #{tpu_custom_call.1} parent=0 // pred_region
    _
  $region25: #{tpu_custom_call.1} parent=0 // pred_fallthru
    _
  // Predicated region
  $region26: #{tpu_custom_call.1} parent=0 // pred_check
    _
  $region27: #{tpu_custom_call.1} parent=0 // pred_check_branch
    %2267 = sbr.rel (0) target = $region29
  $region28: #{tpu_custom_call.1} parent=0 // pred_region
    _
  $region29: #{tpu_custom_call.1} parent=0 // pred_fallthru
    _

</llo_original>
